<compile_context>
chip_gen: v7x
topology: tpu7x:2x2x1
jax: 0.10.0
libtpu: 0.0.40
codegen_flags: <defaults>
</compile_context>

<pallas_src>
import functools

import jax
import jax.numpy as jnp
from jax import lax
from jax.experimental import pallas as pl
from jax.experimental.pallas import tpu as pltpu


def _pose_cnn_kernel(x_ref, w1_ref, s1_ref, b1_ref,
                     rw_ref, rs_ref, rb_ref, wo_ref, o_ref, *, nd, bt):
    """Processes one tile of BT whole batch sequences (TM = BT*Nd rows).

    x_ref : [TM, Nj]        flattened input tile (channels on lanes)
    w1_ref: [Nj, Hpad]      input-layer 1x1 conv weight (transposed, lane-padded)
    s1_ref, b1_ref: [1, Hpad]    folded BN scale / shift for input layer
    rw_ref: [L, Hpad, 3*Hpad]    res-layer conv weights, taps at lane offsets
                                 0 / Hpad / 2*Hpad (128-aligned slices)
    rs_ref, rb_ref: [L, 1, Hpad] folded BN scale / shift per res layer
    wo_ref: [Cout, Hpad]    output 1x1 conv weight (lane-padded on H)
    o_ref : [BT, Cout, Nd]  output tile in the caller's native layout
    """
    tm = bt * nd
    x = x_ref[...]                                     # [TM, Nj]

    # input_layer: 1x1 conv == matmul over channels, then folded BN + ReLU.
    h = jnp.dot(x, w1_ref[...], preferred_element_type=jnp.float32)
    h = jnp.maximum(h * s1_ref[...] + b1_ref[...], 0.0)     # [TM, Hpad]
    hpad = h.shape[1]

    # Halo masks at batch boundaries inside the tile (tile starts at a batch
    # boundary because TM % Nd == 0 and BT divides B). Row n has a valid
    # in-batch left/right neighbour iff its within-batch position is not the
    # first/last one; the roll wrap-around rows land exactly on those
    # positions and are zeroed.
    row = lax.broadcasted_iota(jnp.int32, (tm, 1), 0)
    pos = row % nd
    keep_left = pos != 0                               # h[n-1] exists in-batch
    keep_right = pos != (nd - 1)                       # h[n+1] exists in-batch

    num_res = rw_ref.shape[0]
    for l in range(num_res):                           # static unroll (L == 2)
        # One fused MXU matmul for all three conv taps: [TM, 3*Hpad].
        p = jnp.dot(h, rw_ref[l], preferred_element_type=jnp.float32)
        p0 = p[:, 0:hpad]                  # h[n] @ W0 -> output row n+1
        p1 = p[:, hpad:2 * hpad]           # h[n] @ W1 -> output row n
        p2 = p[:, 2 * hpad:3 * hpad]       # h[n] @ W2 -> output row n-1
        left = jnp.where(keep_left, pltpu.roll(p0, shift=1, axis=0), 0.0)
        right = jnp.where(keep_right, pltpu.roll(p2, shift=tm - 1, axis=0), 0.0)
        z = left + p1 + right
        z = jnp.maximum(z * rs_ref[l] + rb_ref[l], 0.0)
        h = h + z                                      # residual add

    # output_layer: 1x1 conv, no bias. Per-batch trans_b matmul writes the
    # result directly in [Cout, Nd] orientation (no XLU transpose, no padded
    # writeback, nothing left for the wrapper to re-layout).
    wo = wo_ref[...]                                   # [Cout, Hpad]
    for b in range(bt):                                # static unroll
        hh_b = h[b * nd:(b + 1) * nd, :]               # [Nd, Hpad]
        o_ref[b, :, :] = lax.dot_general(
            wo, hh_b,
            dimension_numbers=(((1,), (1,)), ((), ())),
            preferred_element_type=jnp.float32)        # [Cout, Nd]


def pose_cnn_forward(x, x2, params, *, target_rows=512):
    """x: [B, Nj, Nd], x2: [B, Nb, Nd] (unused, as in the PyTorch forward).

    Returns [B, Cout, Nd].
    """
    del x2  # TODO(synk): input_layer_2 / x2 are never used in PoseCNN.forward
    B, Nj, Nd = x.shape
    w1t, s1, b1 = params["w1t"], params["s1"], params["b1"]
    rw, rs, rb = params["rw"], params["rs"], params["rb"]
    wot = params["wot"]
    H, Cout = wot.shape
    L = rw.shape[0]

    # --- 128-lane alignment of the hidden dim and tap offsets -------------
    # (Would be done once at parameter-load time in a real deployment.)
    Hpad = max(128, ((H + 127) // 128) * 128)
    w1t_p = jnp.zeros((Nj, Hpad), jnp.float32).at[:, :H].set(
        w1t.astype(jnp.float32))
    s1_p = jnp.zeros((1, Hpad), jnp.float32).at[:, :H].set(s1)
    b1_p = jnp.zeros((1, Hpad), jnp.float32).at[:, :H].set(b1)
    rw_p = jnp.zeros((L, Hpad, 3 * Hpad), jnp.float32)
    for k in range(3):
        rw_p = rw_p.at[:, :H, k * Hpad:k * Hpad + H].set(
            rw[:, :, k * H:(k + 1) * H])
    rs_p = jnp.zeros((L, 1, Hpad), jnp.float32).at[:, :, :H].set(rs)
    rb_p = jnp.zeros((L, 1, Hpad), jnp.float32).at[:, :, :H].set(rb)
    wo_p = jnp.zeros((Cout, Hpad), jnp.float32).at[:, :H].set(
        jnp.transpose(wot).astype(jnp.float32))

    # --- tile selection: TM = BT*Nd rows, BT divides B --------------------
    bt = max(1, min(B, max(1, target_rows // Nd)))
    while B % bt:
        bt -= 1
    TM = bt * Nd
    M = B * Nd
    grid = (B // bt,)

    # Input in [positions-on-sublanes, channels-on-lanes] layout (one tiny
    # pass over x; all heavy layout work lives inside the kernel / stores).
    x_flat = jnp.transpose(x, (0, 2, 1)).reshape(M, Nj).astype(jnp.float32)

    def resident(arr):
        # Constant index_map -> block revisited, DMA'd once, stays in VMEM.
        return pl.BlockSpec(arr.shape, lambda i, _n=arr.ndim: (0,) * _n)

    kernel = functools.partial(_pose_cnn_kernel, nd=Nd, bt=bt)

    out = pl.pallas_call(
        kernel,
        out_shape=jax.ShapeDtypeStruct((B, Cout, Nd), jnp.float32),
        grid=grid,
        in_specs=[
            pl.BlockSpec((TM, Nj), lambda i: (i, 0)),
            resident(w1t_p), resident(s1_p), resident(b1_p),
            resident(rw_p), resident(rs_p), resident(rb_p),
            resident(wo_p),
        ],
        out_specs=pl.BlockSpec((bt, Cout, Nd), lambda i: (i, 0, 0)),
        compiler_params=pltpu.CompilerParams(
            dimension_semantics=("parallel",)),
    )(x_flat, w1t_p, s1_p, b1_p, rw_p, rs_p, rb_p, wo_p)
    # Output already in [B, Cout, Nd]; nothing left to slice / reshape.
    return out


def init_params(key, num_joints, num_bones, hidden_size, output_size,
                eps=1e-5):
    """Deterministic synthetic parameters matching the PyTorch module shapes.

    BatchNorm1d is folded to inference-mode per-channel scale/shift. All
    Conv1d layers in the PyTorch module are bias=False, so there are no conv
    biases to fold. Res-layer conv weights are stored tap-stacked as [H, 3H]
    so each res layer is a single MXU matmul in the kernel.
    """
    del num_bones  # input_layer_2 params are never used in forward()
    keys = jax.random.split(key, 12)

    def bn_fold(k):
        kg, kb, km, kv = jax.random.split(k, 4)
        gamma = 1.0 + 0.1 * jax.random.normal(kg, (hidden_size,))
        beta = 0.1 * jax.random.normal(kb, (hidden_size,))
        mean = 0.1 * jax.random.normal(km, (hidden_size,))
        var = jax.nn.softplus(jax.random.normal(kv, (hidden_size,))) + 0.5
        scale = gamma / jnp.sqrt(var + eps)
        shift = beta - mean * scale
        return (scale[None, :].astype(jnp.float32),
                shift[None, :].astype(jnp.float32))

    # input_layer: Conv1d weight [H, Nj, 1] -> store as [Nj, H]
    w1 = 0.1 * jax.random.normal(keys[0], (hidden_size, num_joints))
    s1, b1 = bn_fold(keys[1])

    rw_list, rs_list, rb_list = [], [], []
    for l in range(2):
        # res conv weight [H, H, 3] (co, ci, k); tap k multiplies h[n + k - 1].
        w = 0.05 * jax.random.normal(keys[2 + 2 * l],
                                     (hidden_size, hidden_size, 3))
        taps = [jnp.transpose(w[:, :, k]) for k in range(3)]   # [ci, co] each
        rw_list.append(jnp.concatenate(taps, axis=1))          # [H, 3H]
        s, b = bn_fold(keys[3 + 2 * l])
        rs_list.append(s)
        rb_list.append(b)

    # output_layer: Conv1d weight [Cout, H, 1] -> store as [H, Cout]
    wo = 0.1 * jax.random.normal(keys[10], (output_size, hidden_size))

    return dict(
        w1t=jnp.transpose(w1).astype(jnp.float32),       # [Nj, H]
        s1=s1, b1=b1,                                    # [1, H]
        rw=jnp.stack(rw_list).astype(jnp.float32),       # [2, H, 3H]
        rs=jnp.stack(rs_list).astype(jnp.float32),       # [2, 1, H]
        rb=jnp.stack(rb_list).astype(jnp.float32),       # [2, 1, H]
        wot=jnp.transpose(wo).astype(jnp.float32),       # [H, Cout]
    )


def pose_cnn_reference(x, params):
    """Pure-JAX reference mirroring the PyTorch forward (eval-mode BN)."""
    h = jnp.einsum('bnc,ch->bnh', jnp.transpose(x, (0, 2, 1)), params["w1t"])
    h = jnp.maximum(h * params["s1"] + params["b1"], 0.0)
    B, N, H = h.shape
    for l in range(params["rw"].shape[0]):
        w = params["rw"][l]                               # [H, 3H]
        w0, w1, w2 = w[:, :H], w[:, H:2 * H], w[:, 2 * H:]
        hp = jnp.pad(h, ((0, 0), (1, 1), (0, 0)))
        z = (jnp.einsum('bnc,ch->bnh', hp[:, 0:N], w0)
             + jnp.einsum('bnc,ch->bnh', hp[:, 1:N + 1], w1)
             + jnp.einsum('bnc,ch->bnh', hp[:, 2:N + 2], w2))
        z = jnp.maximum(z * params["rs"][l] + params["rb"][l], 0.0)
        h = h + z
    o = jnp.einsum('bnh,ho->bno', h, params["wot"])
    return jnp.transpose(o, (0, 2, 1))


if __name__ == "__main__":
    B, num_joints, num_bones, Nd = 4, 4, 5, 16
    hidden_size, output_size = 32, 6

    key = jax.random.PRNGKey(0)
    kx, kx2, kp = jax.random.split(key, 3)
    x = jax.random.normal(kx, (B, num_joints, Nd), dtype=jnp.float32)
    x2 = jax.random.normal(kx2, (B, num_bones, Nd), dtype=jnp.float32)
    params = init_params(kp, num_joints, num_bones, hidden_size, output_size)

    # target_rows=32 forces a 2-step grid at this small demo size so the
    # tiled (pipelined / weight-resident) path is actually exercised.
    out = pose_cnn_forward(x, x2, params, target_rows=32)
    out = jax.block_until_ready(out)

    ref = pose_cnn_reference(x, params)
    assert out.shape == (B, output_size, Nd), out.shape
    assert jnp.allclose(out, ref, atol=1e-4, rtol=1e-4), (
        float(jnp.max(jnp.abs(out - ref))))
    print("KERNEL_OK")
</pallas_src>

<mosaic_0001>
module attributes {stable_mosaic.version = 11 : i64} {
  func.func @_pose_cnn_kernel(%arg0: i32, %arg1: memref<32x4xf32, #tpu.memory_space<vmem>>, %arg2: memref<4x128xf32, #tpu.memory_space<vmem>>, %arg3: memref<1x128xf32, #tpu.memory_space<vmem>>, %arg4: memref<1x128xf32, #tpu.memory_space<vmem>>, %arg5: memref<2x128x384xf32, #tpu.memory_space<vmem>>, %arg6: memref<2x1x128xf32, #tpu.memory_space<vmem>>, %arg7: memref<2x1x128xf32, #tpu.memory_space<vmem>>, %arg8: memref<6x128xf32, #tpu.memory_space<vmem>>, %arg9: memref<2x6x16xf32, #tpu.memory_space<vmem>>) attributes {dimension_semantics = [#tpu.dimension_semantics<parallel>], iteration_bounds = array<i64: 2>, scalar_prefetch = 0 : i64, scratch_operands = 0 : i64, tpu.core_type = #tpu.core_type<tc>, window_params = [{transform_indices = @transform_0, window_bounds = array<i64: 32, 4>}, {pipeline_mode = #tpu.pipeline_mode<synchronous>, transform_indices = @transform_1, window_bounds = array<i64: 4, 128>}, {pipeline_mode = #tpu.pipeline_mode<synchronous>, transform_indices = @transform_2, window_bounds = array<i64: 1, 128>}, {pipeline_mode = #tpu.pipeline_mode<synchronous>, transform_indices = @transform_3, window_bounds = array<i64: 1, 128>}, {pipeline_mode = #tpu.pipeline_mode<synchronous>, transform_indices = @transform_4, window_bounds = array<i64: 2, 128, 384>}, {pipeline_mode = #tpu.pipeline_mode<synchronous>, transform_indices = @transform_5, window_bounds = array<i64: 2, 1, 128>}, {pipeline_mode = #tpu.pipeline_mode<synchronous>, transform_indices = @transform_6, window_bounds = array<i64: 2, 1, 128>}, {pipeline_mode = #tpu.pipeline_mode<synchronous>, transform_indices = @transform_7, window_bounds = array<i64: 6, 128>}, {transform_indices = @transform_8, window_bounds = array<i64: 2, 6, 16>}]} {
    %c0 = arith.constant 0 : index
    %c0_0 = arith.constant 0 : index
    %0 = vector.load %arg1[%c0, %c0_0] : memref<32x4xf32, #tpu.memory_space<vmem>>, vector<32x4xf32>
    %c0_1 = arith.constant 0 : index
    %c0_2 = arith.constant 0 : index
    %1 = vector.load %arg2[%c0_1, %c0_2] : memref<4x128xf32, #tpu.memory_space<vmem>>, vector<4x128xf32>
    %cst = arith.constant dense<0.000000e+00> : vector<32x128xf32>
    %2 = tpu.matmul %0, %1, %cst {dimension_numbers = #tpu.dot_dimension_numbers<[1], [0], [0], [1], [0, 0, 1, 1], [], []>} : vector<32x4xf32>, vector<4x128xf32>, vector<32x128xf32> -> vector<32x128xf32>
    %c0_3 = arith.constant 0 : index
    %c0_4 = arith.constant 0 : index
    %3 = vector.load %arg3[%c0_3, %c0_4] : memref<1x128xf32, #tpu.memory_space<vmem>>, vector<1x128xf32>
    %4 = vector.broadcast %3 : vector<1x128xf32> to vector<32x128xf32>
    %5 = arith.mulf %2, %4 : vector<32x128xf32>
    %c0_5 = arith.constant 0 : index
    %c0_6 = arith.constant 0 : index
    %6 = vector.load %arg4[%c0_5, %c0_6] : memref<1x128xf32, #tpu.memory_space<vmem>>, vector<1x128xf32>
    %7 = vector.broadcast %6 : vector<1x128xf32> to vector<32x128xf32>
    %8 = arith.addf %5, %7 : vector<32x128xf32>
    %cst_7 = arith.constant 0.000000e+00 : f32
    %9 = vector.broadcast %cst_7 : f32 to vector<32x128xf32>
    %10 = arith.maximumf %8, %9 : vector<32x128xf32>
    %11 = tpu.iota {dimensions = array<i32: 0>} : vector<32x1xi32>
    %c16_i32 = arith.constant 16 : i32
    %c0_i32 = arith.constant 0 : i32
    %12 = arith.cmpi eq, %c16_i32, %c0_i32 : i32
    %c1_i32 = arith.constant 1 : i32
    %13 = arith.select %12, %c1_i32, %c16_i32 : i32
    %14 = vector.broadcast %13 : i32 to vector<32x1xi32>
    %15 = arith.remsi %11, %14 : vector<32x1xi32>
    %c0_i32_8 = arith.constant 0 : i32
    %16 = vector.broadcast %c0_i32_8 : i32 to vector<32x1xi32>
    %17 = arith.cmpi ne, %15, %16 : vector<32x1xi32>
    %c0_i32_9 = arith.constant 0 : i32
    %18 = vector.broadcast %c0_i32_9 : i32 to vector<32x1xi32>
    %19 = arith.cmpi slt, %15, %18 : vector<32x1xi32>
    %c0_i32_10 = arith.constant 0 : i32
    %20 = arith.cmpi slt, %13, %c0_i32_10 : i32
    %21 = vector.broadcast %20 : i1 to vector<32x1xi1>
    %22 = vector.broadcast %21 : vector<32x1xi1> to vector<32x1xi1>
    %23 = arith.xori %19, %22 : vector<32x1xi1>
    %24 = arith.andi %23, %17 : vector<32x1xi1>
    %25 = vector.broadcast %13 : i32 to vector<32x1xi32>
    %26 = arith.addi %15, %25 : vector<32x1xi32>
    %27 = arith.select %24, %26, %15 : vector<32x1xi1>, vector<32x1xi32>
    %c0_i32_11 = arith.constant 0 : i32
    %28 = vector.broadcast %c0_i32_11 : i32 to vector<32x1xi32>
    %29 = arith.cmpi ne, %27, %28 : vector<32x1xi32>
    %c15_i32 = arith.constant 15 : i32
    %30 = vector.broadcast %c15_i32 : i32 to vector<32x1xi32>
    %31 = arith.cmpi ne, %27, %30 : vector<32x1xi32>
    %c0_12 = arith.constant 0 : index
    %c0_13 = arith.constant 0 : index
    %c0_14 = arith.constant 0 : index
    %32 = vector.load %arg5[%c0_12, %c0_13, %c0_14] : memref<2x128x384xf32, #tpu.memory_space<vmem>>, vector<1x128x384xf32>
    %33 = vector.shape_cast %32 : vector<1x128x384xf32> to vector<128x384xf32>
    %cst_15 = arith.constant dense<0.000000e+00> : vector<32x384xf32>
    %34 = tpu.matmul %10, %33, %cst_15 {dimension_numbers = #tpu.dot_dimension_numbers<[1], [0], [0], [1], [0, 0, 1, 1], [], []>} : vector<32x128xf32>, vector<128x384xf32>, vector<32x384xf32> -> vector<32x384xf32>
    %35 = vector.extract_strided_slice %34 {offsets = [0, 0], sizes = [32, 128], strides = [1, 1]} : vector<32x384xf32> to vector<32x128xf32>
    %36 = vector.extract_strided_slice %34 {offsets = [0, 128], sizes = [32, 128], strides = [1, 1]} : vector<32x384xf32> to vector<32x128xf32>
    %37 = vector.extract_strided_slice %34 {offsets = [0, 256], sizes = [32, 128], strides = [1, 1]} : vector<32x384xf32> to vector<32x128xf32>
    %c1_i32_16 = arith.constant 1 : i32
    %38 = tpu.dynamic_rotate %35 by %c1_i32_16 dim 0 : vector<32x128xf32>, i32 -> vector<32x128xf32>
    %cst_17 = arith.constant 0.000000e+00 : f32
    %39 = vector.shape_cast %29 : vector<32x1xi1> to vector<32x1xi1>
    %40 = vector.broadcast %39 : vector<32x1xi1> to vector<32x128xi1>
    %41 = vector.broadcast %cst_17 : f32 to vector<32x128xf32>
    %42 = arith.select %40, %38, %41 : vector<32x128xi1>, vector<32x128xf32>
    %c31_i32 = arith.constant 31 : i32
    %43 = tpu.dynamic_rotate %37 by %c31_i32 dim 0 : vector<32x128xf32>, i32 -> vector<32x128xf32>
    %cst_18 = arith.constant 0.000000e+00 : f32
    %44 = vector.shape_cast %31 : vector<32x1xi1> to vector<32x1xi1>
    %45 = vector.broadcast %44 : vector<32x1xi1> to vector<32x128xi1>
    %46 = vector.broadcast %cst_18 : f32 to vector<32x128xf32>
    %47 = arith.select %45, %43, %46 : vector<32x128xi1>, vector<32x128xf32>
    %48 = arith.addf %42, %36 : vector<32x128xf32>
    %49 = arith.addf %48, %47 : vector<32x128xf32>
    %c0_19 = arith.constant 0 : index
    %c0_20 = arith.constant 0 : index
    %c0_21 = arith.constant 0 : index
    %50 = vector.load %arg6[%c0_19, %c0_20, %c0_21] : memref<2x1x128xf32, #tpu.memory_space<vmem>>, vector<1x1x128xf32>
    %51 = vector.shape_cast %50 : vector<1x1x128xf32> to vector<1x128xf32>
    %52 = vector.broadcast %51 : vector<1x128xf32> to vector<32x128xf32>
    %53 = arith.mulf %49, %52 : vector<32x128xf32>
    %c0_22 = arith.constant 0 : index
    %c0_23 = arith.constant 0 : index
    %c0_24 = arith.constant 0 : index
    %54 = vector.load %arg7[%c0_22, %c0_23, %c0_24] : memref<2x1x128xf32, #tpu.memory_space<vmem>>, vector<1x1x128xf32>
    %55 = vector.shape_cast %54 : vector<1x1x128xf32> to vector<1x128xf32>
    %56 = vector.broadcast %55 : vector<1x128xf32> to vector<32x128xf32>
    %57 = arith.addf %53, %56 : vector<32x128xf32>
    %cst_25 = arith.constant 0.000000e+00 : f32
    %58 = vector.broadcast %cst_25 : f32 to vector<32x128xf32>
    %59 = arith.maximumf %57, %58 : vector<32x128xf32>
    %60 = arith.addf %10, %59 : vector<32x128xf32>
    %c1 = arith.constant 1 : index
    %c0_26 = arith.constant 0 : index
    %c0_27 = arith.constant 0 : index
    %61 = vector.load %arg5[%c1, %c0_26, %c0_27] : memref<2x128x384xf32, #tpu.memory_space<vmem>>, vector<1x128x384xf32>
    %62 = vector.shape_cast %61 : vector<1x128x384xf32> to vector<128x384xf32>
    %cst_28 = arith.constant dense<0.000000e+00> : vector<32x384xf32>
    %63 = tpu.matmul %60, %62, %cst_28 {dimension_numbers = #tpu.dot_dimension_numbers<[1], [0], [0], [1], [0, 0, 1, 1], [], []>} : vector<32x128xf32>, vector<128x384xf32>, vector<32x384xf32> -> vector<32x384xf32>
    %64 = vector.extract_strided_slice %63 {offsets = [0, 0], sizes = [32, 128], strides = [1, 1]} : vector<32x384xf32> to vector<32x128xf32>
    %65 = vector.extract_strided_slice %63 {offsets = [0, 128], sizes = [32, 128], strides = [1, 1]} : vector<32x384xf32> to vector<32x128xf32>
    %66 = vector.extract_strided_slice %63 {offsets = [0, 256], sizes = [32, 128], strides = [1, 1]} : vector<32x384xf32> to vector<32x128xf32>
    %c1_i32_29 = arith.constant 1 : i32
    %67 = tpu.dynamic_rotate %64 by %c1_i32_29 dim 0 : vector<32x128xf32>, i32 -> vector<32x128xf32>
    %cst_30 = arith.constant 0.000000e+00 : f32
    %68 = vector.shape_cast %29 : vector<32x1xi1> to vector<32x1xi1>
    %69 = vector.broadcast %68 : vector<32x1xi1> to vector<32x128xi1>
    %70 = vector.broadcast %cst_30 : f32 to vector<32x128xf32>
    %71 = arith.select %69, %67, %70 : vector<32x128xi1>, vector<32x128xf32>
    %c31_i32_31 = arith.constant 31 : i32
    %72 = tpu.dynamic_rotate %66 by %c31_i32_31 dim 0 : vector<32x128xf32>, i32 -> vector<32x128xf32>
    %cst_32 = arith.constant 0.000000e+00 : f32
    %73 = vector.shape_cast %31 : vector<32x1xi1> to vector<32x1xi1>
    %74 = vector.broadcast %73 : vector<32x1xi1> to vector<32x128xi1>
    %75 = vector.broadcast %cst_32 : f32 to vector<32x128xf32>
    %76 = arith.select %74, %72, %75 : vector<32x128xi1>, vector<32x128xf32>
    %77 = arith.addf %71, %65 : vector<32x128xf32>
    %78 = arith.addf %77, %76 : vector<32x128xf32>
    %c1_33 = arith.constant 1 : index
    %c0_34 = arith.constant 0 : index
    %c0_35 = arith.constant 0 : index
    %79 = vector.load %arg6[%c1_33, %c0_34, %c0_35] : memref<2x1x128xf32, #tpu.memory_space<vmem>>, vector<1x1x128xf32>
    %80 = vector.shape_cast %79 : vector<1x1x128xf32> to vector<1x128xf32>
    %81 = vector.broadcast %80 : vector<1x128xf32> to vector<32x128xf32>
    %82 = arith.mulf %78, %81 : vector<32x128xf32>
    %c1_36 = arith.constant 1 : index
    %c0_37 = arith.constant 0 : index
    %c0_38 = arith.constant 0 : index
    %83 = vector.load %arg7[%c1_36, %c0_37, %c0_38] : memref<2x1x128xf32, #tpu.memory_space<vmem>>, vector<1x1x128xf32>
    %84 = vector.shape_cast %83 : vector<1x1x128xf32> to vector<1x128xf32>
    %85 = vector.broadcast %84 : vector<1x128xf32> to vector<32x128xf32>
    %86 = arith.addf %82, %85 : vector<32x128xf32>
    %cst_39 = arith.constant 0.000000e+00 : f32
    %87 = vector.broadcast %cst_39 : f32 to vector<32x128xf32>
    %88 = arith.maximumf %86, %87 : vector<32x128xf32>
    %89 = arith.addf %60, %88 : vector<32x128xf32>
    %c0_40 = arith.constant 0 : index
    %c0_41 = arith.constant 0 : index
    %90 = vector.load %arg8[%c0_40, %c0_41] : memref<6x128xf32, #tpu.memory_space<vmem>>, vector<6x128xf32>
    %91 = vector.extract_strided_slice %89 {offsets = [0, 0], sizes = [16, 128], strides = [1, 1]} : vector<32x128xf32> to vector<16x128xf32>
    %cst_42 = arith.constant dense<0.000000e+00> : vector<6x16xf32>
    %92 = tpu.matmul %90, %91, %cst_42 {dimension_numbers = #tpu.dot_dimension_numbers<[1], [1], [0], [0], [0, 0, 1, 0], [], []>} : vector<6x128xf32>, vector<16x128xf32>, vector<6x16xf32> -> vector<6x16xf32>
    %c0_43 = arith.constant 0 : index
    %c0_44 = arith.constant 0 : index
    %c0_45 = arith.constant 0 : index
    %93 = vector.load %arg9[%c0_43, %c0_44, %c0_45] : memref<2x6x16xf32, #tpu.memory_space<vmem>>, vector<1x6x16xf32>
    %94 = vector.shape_cast %93 : vector<1x6x16xf32> to vector<6x16xf32>
    %95 = vector.shape_cast %92 : vector<6x16xf32> to vector<1x6x16xf32>
    tpu.vector_store %arg9[%c0_43, %c0_44, %c0_45], %95 {strides = array<i32>} : memref<2x6x16xf32, #tpu.memory_space<vmem>>, vector<1x6x16xf32>,
    %96 = vector.extract_strided_slice %89 {offsets = [16, 0], sizes = [16, 128], strides = [1, 1]} : vector<32x128xf32> to vector<16x128xf32>
    %cst_46 = arith.constant dense<0.000000e+00> : vector<6x16xf32>
    %97 = tpu.matmul %90, %96, %cst_46 {dimension_numbers = #tpu.dot_dimension_numbers<[1], [1], [0], [0], [0, 0, 1, 0], [], []>} : vector<6x128xf32>, vector<16x128xf32>, vector<6x16xf32> -> vector<6x16xf32>
    %c1_47 = arith.constant 1 : index
    %c0_48 = arith.constant 0 : index
    %c0_49 = arith.constant 0 : index
    %98 = vector.load %arg9[%c1_47, %c0_48, %c0_49] : memref<2x6x16xf32, #tpu.memory_space<vmem>>, vector<1x6x16xf32>
    %99 = vector.shape_cast %98 : vector<1x6x16xf32> to vector<6x16xf32>
    %100 = vector.shape_cast %97 : vector<6x16xf32> to vector<1x6x16xf32>
    tpu.vector_store %arg9[%c1_47, %c0_48, %c0_49], %100 {strides = array<i32>} : memref<2x6x16xf32, #tpu.memory_space<vmem>>, vector<1x6x16xf32>,
    return
  }
  func.func @transform_0(%arg0: i32) -> (i32, i32) {
    %c0_i32 = arith.constant 0 : i32
    %c0_i32_0 = arith.constant 0 : i32
    return %arg0, %c0_i32 : i32, i32
  }
  func.func @transform_1(%arg0: i32) -> (i32, i32) {
    %c0_i32 = arith.constant 0 : i32
    %c0_i32_0 = arith.constant 0 : i32
    %c0_i32_1 = arith.constant 0 : i32
    return %c0_i32, %c0_i32_0 : i32, i32
  }
  func.func @transform_2(%arg0: i32) -> (i32, i32) {
    %c0_i32 = arith.constant 0 : i32
    %c0_i32_0 = arith.constant 0 : i32
    %c0_i32_1 = arith.constant 0 : i32
    return %c0_i32, %c0_i32_0 : i32, i32
  }
  func.func @transform_3(%arg0: i32) -> (i32, i32) {
    %c0_i32 = arith.constant 0 : i32
    %c0_i32_0 = arith.constant 0 : i32
    %c0_i32_1 = arith.constant 0 : i32
    return %c0_i32, %c0_i32_0 : i32, i32
  }
  func.func @transform_4(%arg0: i32) -> (i32, i32, i32) {
    %c0_i32 = arith.constant 0 : i32
    %c0_i32_0 = arith.constant 0 : i32
    %c0_i32_1 = arith.constant 0 : i32
    %c0_i32_2 = arith.constant 0 : i32
    return %c0_i32, %c0_i32_0, %c0_i32_1 : i32, i32, i32
  }
  func.func @transform_5(%arg0: i32) -> (i32, i32, i32) {
    %c0_i32 = arith.constant 0 : i32
    %c0_i32_0 = arith.constant 0 : i32
    %c0_i32_1 = arith.constant 0 : i32
    %c0_i32_2 = arith.constant 0 : i32
    return %c0_i32, %c0_i32_0, %c0_i32_1 : i32, i32, i32
  }
  func.func @transform_6(%arg0: i32) -> (i32, i32, i32) {
    %c0_i32 = arith.constant 0 : i32
    %c0_i32_0 = arith.constant 0 : i32
    %c0_i32_1 = arith.constant 0 : i32
    %c0_i32_2 = arith.constant 0 : i32
    return %c0_i32, %c0_i32_0, %c0_i32_1 : i32, i32, i32
  }
  func.func @transform_7(%arg0: i32) -> (i32, i32) {
    %c0_i32 = arith.constant 0 : i32
    %c0_i32_0 = arith.constant 0 : i32
    %c0_i32_1 = arith.constant 0 : i32
    return %c0_i32, %c0_i32_0 : i32, i32
  }
  func.func @transform_8(%arg0: i32) -> (i32, i32, i32) {
    %c0_i32 = arith.constant 0 : i32
    %c0_i32_0 = arith.constant 0 : i32
    %c0_i32_1 = arith.constant 0 : i32
    return %arg0, %c0_i32, %c0_i32_0 : i32, i32, i32
  }
}

</mosaic_0001>

<llo_original>
// kernel: tpu_custom_call.1
$region0: #{tpu_custom_call.1}
  #allocation0 [shape = 'u32[]', space=smem, size = 0x4, offset = 0x4, fixed_abs, tag = 'smem constant byte address 0x4 - core index']
  #allocation1 [shape = 'u32[144,128]{1,0:T(1,128)}', space=vmem, size = 0x12000, scoped, tag = 'internal scratch']
  %s0 = inlined_call_operand.vmem [shape: f32[64,4], index: 0, kind: input, shape index: {}]
  %s1 = inlined_call_operand.vmem [shape: f32[4,128], index: 1, kind: input, shape index: {}]
  %s2 = inlined_call_operand.vmem [shape: f32[1,128], index: 2, kind: input, shape index: {}]
  %s3 = inlined_call_operand.vmem [shape: f32[1,128], index: 3, kind: input, shape index: {}]
  %s4 = inlined_call_operand.hbm [shape: f32[2,128,384], index: 4, kind: input, shape index: {}]
  %s5 = inlined_call_operand.vmem [shape: f32[2,1,128], index: 5, kind: input, shape index: {}]
  %s6 = inlined_call_operand.vmem [shape: f32[2,1,128], index: 6, kind: input, shape index: {}]
  %s7 = inlined_call_operand.vmem [shape: f32[6,128], index: 7, kind: input, shape index: {}]
  %s8 = inlined_call_operand.vmem [shape: f32[4,6,16], index: 8, kind: output, shape index: {}]
  %s9 = sld [smem:[#allocation0]]
  $region69: #{tpu_custom_call.1} parent=0
    _
  %s11 = ssub.s32 1, %s9
  %s12 = scalar_select 0, %s11, %s9
  $region1: #{tpu_custom_call.1} parent=0
    #allocation2 [shape = 'u8[393216]{0}', space=vmem, size = 0x60000, scoped, tag = 'input window, operand 4, single buffered']
    #allocation3 [shape = 's32[2]{0}', space=sflag, size = 0x8, scoped, tag = 'scoped memory for tpu_custom_call.1']
    %13 = vsyncpa [#allocation3], 0
    loop: start=0, step=1, limit=4
    $region2: #{tpu_custom_call.1} parent=1 // loop_pre_header
      _
    $region3: #{tpu_custom_call.1} parent=1 // loop_header
      %s15 = sphi 0, %s19
      %p16 = scmp.ge.s32.totalorder %s15, 4
      %s25 = sphi 0, %s27
      %s28 = sphi 0, %s25
      %s29 = sphi 0, %s28
      %s45 = sphi 0, %s29
      %s49 = sphi 0, %s49
      %s51 = sphi 0, %s49
      %s52 = sphi 0, %s51
      %s66 = sphi 0, %s52
      %s70 = sphi 0, %s70
      %s72 = sphi 0, %s70
      %s73 = sphi 0, %s72
      %s87 = sphi 0, %s73
      %s91 = sphi 0, %s91
      %s93 = sphi 0, %s91
      %s94 = sphi 0, %s93
      %s108 = sphi 0, %s94
      %s112 = sphi 0, %s112
      %s114 = sphi 0, %s112
      %s115 = sphi 0, %s114
      %s129 = sphi 0, %s115
      %s133 = sphi 0, %s133
      %s135 = sphi 0, %s133
      %s136 = sphi 0, %s135
      %s150 = sphi 0, %s136
      %s154 = sphi 0, %s154
      %s156 = sphi 0, %s154
      %s157 = sphi 0, %s156
      %s171 = sphi 0, %s157
      %s175 = sphi 0, %s175
      %s177 = sphi 0, %s175
      %s178 = sphi 0, %s177
      %s192 = sphi 0, %s178
      %s198 = sphi 0, %s200
      %s201 = sphi 0, %s198
      %s202 = sphi 0, %s201
      %s218 = sphi 0, %s202
    $region4: #{tpu_custom_call.1} parent=1 // loop_header_branch
      %18 = sbr.rel (%p16) target = $region8
    $region5: #{tpu_custom_call.1} parent=1 // loop_body
      %s20 = ssub.s32 %s15, 1
      %s21 = ssub.s32 %s15, 2
      %s22 = sadd.s32 %s15, 1
      %s23 = ssub.s32 %s15, %s22
      %p24 = scmp.eq.s32.totalorder %s23, 0
      %s26 = sadd.s32 %s25, 1
      %s27 = scalar_select %p24, %s25, %s26
      %p30 = pneg %p24
      %p31 = scmp.eq.s32.totalorder %s15, 1
      %p32 = por %p30, %p31
      %p33 = scmp.ne.s32.totalorder %s25, %s28
      %p34 = scmp.eq.s32.totalorder %s15, 0
      %p35 = por %p33, %p34
      %p36 = scmp.ne.s32.totalorder %s25, %s28
      %p37 = scmp.eq.s32.totalorder %s20, 1
      %p38 = por %p36, %p37
      %p39 = scmp.ne.s32.totalorder %s28, %s29
      %p40 = scmp.eq.s32.totalorder %s20, 0
      %p41 = por %p39, %p40
      %p42 = scmp.ne.s32.totalorder %s28, %s29
      %p43 = scmp.eq.s32.totalorder %s21, 1
      %p44 = por %p42, %p43
      %p46 = scmp.ne.s32.totalorder %s29, %s45
      %p47 = scmp.eq.s32.totalorder %s21, 0
      %p48 = por %p46, %p47
      %s50 = sadd.s32 %s49, 1
      %p53 = scmp.eq.s32.totalorder %s15, 1
      %p54 = scmp.ne.s32.totalorder %s49, %s51
      %p55 = scmp.eq.s32.totalorder %s15, 0
      %p56 = por %p54, %p55
      %p57 = scmp.ne.s32.totalorder %s49, %s51
      %p58 = scmp.eq.s32.totalorder %s20, 1
      %p59 = por %p57, %p58
      %p60 = scmp.ne.s32.totalorder %s51, %s52
      %p61 = scmp.eq.s32.totalorder %s20, 0
      %p62 = por %p60, %p61
      %p63 = scmp.ne.s32.totalorder %s51, %s52
      %p64 = scmp.eq.s32.totalorder %s21, 1
      %p65 = por %p63, %p64
      %p67 = scmp.ne.s32.totalorder %s52, %s66
      %p68 = scmp.eq.s32.totalorder %s21, 0
      %p69 = por %p67, %p68
      %s71 = sadd.s32 %s70, 1
      %p74 = scmp.eq.s32.totalorder %s15, 1
      %p75 = scmp.ne.s32.totalorder %s70, %s72
      %p76 = scmp.eq.s32.totalorder %s15, 0
      %p77 = por %p75, %p76
      %p78 = scmp.ne.s32.totalorder %s70, %s72
      %p79 = scmp.eq.s32.totalorder %s20, 1
      %p80 = por %p78, %p79
      %p81 = scmp.ne.s32.totalorder %s72, %s73
      %p82 = scmp.eq.s32.totalorder %s20, 0
      %p83 = por %p81, %p82
      %p84 = scmp.ne.s32.totalorder %s72, %s73
      %p85 = scmp.eq.s32.totalorder %s21, 1
      %p86 = por %p84, %p85
      %p88 = scmp.ne.s32.totalorder %s73, %s87
      %p89 = scmp.eq.s32.totalorder %s21, 0
      %p90 = por %p88, %p89
      %s92 = sadd.s32 %s91, 1
      %p95 = scmp.eq.s32.totalorder %s15, 1
      %p96 = scmp.ne.s32.totalorder %s91, %s93
      %p97 = scmp.eq.s32.totalorder %s15, 0
      %p98 = por %p96, %p97
      %p99 = scmp.ne.s32.totalorder %s91, %s93
      %p100 = scmp.eq.s32.totalorder %s20, 1
      %p101 = por %p99, %p100
      %p102 = scmp.ne.s32.totalorder %s93, %s94
      %p103 = scmp.eq.s32.totalorder %s20, 0
      %p104 = por %p102, %p103
      %p105 = scmp.ne.s32.totalorder %s93, %s94
      %p106 = scmp.eq.s32.totalorder %s21, 1
      %p107 = por %p105, %p106
      %p109 = scmp.ne.s32.totalorder %s94, %s108
      %p110 = scmp.eq.s32.totalorder %s21, 0
      %p111 = por %p109, %p110
      %s113 = sadd.s32 %s112, 1
      %p116 = scmp.eq.s32.totalorder %s15, 1
      %p117 = scmp.ne.s32.totalorder %s112, %s114
      %p118 = scmp.eq.s32.totalorder %s15, 0
      %p119 = por %p117, %p118
      %p120 = scmp.ne.s32.totalorder %s112, %s114
      %p121 = scmp.eq.s32.totalorder %s20, 1
      %p122 = por %p120, %p121
      %p123 = scmp.ne.s32.totalorder %s114, %s115
      %p124 = scmp.eq.s32.totalorder %s20, 0
      %p125 = por %p123, %p124
      %p126 = scmp.ne.s32.totalorder %s114, %s115
      %p127 = scmp.eq.s32.totalorder %s21, 1
      %p128 = por %p126, %p127
      %p130 = scmp.ne.s32.totalorder %s115, %s129
      %p131 = scmp.eq.s32.totalorder %s21, 0
      %p132 = por %p130, %p131
      %s134 = sadd.s32 %s133, 1
      %p137 = scmp.eq.s32.totalorder %s15, 1
      %p138 = scmp.ne.s32.totalorder %s133, %s135
      %p139 = scmp.eq.s32.totalorder %s15, 0
      %p140 = por %p138, %p139
      %p141 = scmp.ne.s32.totalorder %s133, %s135
      %p142 = scmp.eq.s32.totalorder %s20, 1
      %p143 = por %p141, %p142
      %p144 = scmp.ne.s32.totalorder %s135, %s136
      %p145 = scmp.eq.s32.totalorder %s20, 0
      %p146 = por %p144, %p145
      %p147 = scmp.ne.s32.totalorder %s135, %s136
      %p148 = scmp.eq.s32.totalorder %s21, 1
      %p149 = por %p147, %p148
      %p151 = scmp.ne.s32.totalorder %s136, %s150
      %p152 = scmp.eq.s32.totalorder %s21, 0
      %p153 = por %p151, %p152
      %s155 = sadd.s32 %s154, 1
      %p158 = scmp.eq.s32.totalorder %s15, 1
      %p159 = scmp.ne.s32.totalorder %s154, %s156
      %p160 = scmp.eq.s32.totalorder %s15, 0
      %p161 = por %p159, %p160
      %p162 = scmp.ne.s32.totalorder %s154, %s156
      %p163 = scmp.eq.s32.totalorder %s20, 1
      %p164 = por %p162, %p163
      %p165 = scmp.ne.s32.totalorder %s156, %s157
      %p166 = scmp.eq.s32.totalorder %s20, 0
      %p167 = por %p165, %p166
      %p168 = scmp.ne.s32.totalorder %s156, %s157
      %p169 = scmp.eq.s32.totalorder %s21, 1
      %p170 = por %p168, %p169
      %p172 = scmp.ne.s32.totalorder %s157, %s171
      %p173 = scmp.eq.s32.totalorder %s21, 0
      %p174 = por %p172, %p173
      %s176 = sadd.s32 %s175, 1
      %p179 = scmp.eq.s32.totalorder %s15, 1
      %p180 = scmp.ne.s32.totalorder %s175, %s177
      %p181 = scmp.eq.s32.totalorder %s15, 0
      %p182 = por %p180, %p181
      %p183 = scmp.ne.s32.totalorder %s175, %s177
      %p184 = scmp.eq.s32.totalorder %s20, 1
      %p185 = por %p183, %p184
      %p186 = scmp.ne.s32.totalorder %s177, %s178
      %p187 = scmp.eq.s32.totalorder %s20, 0
      %p188 = por %p186, %p187
      %p189 = scmp.ne.s32.totalorder %s177, %s178
      %p190 = scmp.eq.s32.totalorder %s21, 1
      %p191 = por %p189, %p190
      %p193 = scmp.ne.s32.totalorder %s178, %s192
      %p194 = scmp.eq.s32.totalorder %s21, 0
      %p195 = por %p193, %p194
      %s196 = ssub.s32 %s15, %s22
      %p197 = scmp.eq.s32.totalorder %s196, 0
      %s199 = sadd.s32 %s198, 1
      %s200 = scalar_select %p197, %s198, %s199
      %p203 = pneg %p197
      %p204 = scmp.eq.s32.totalorder %s15, 1
      %p205 = por %p203, %p204
      %p206 = scmp.ne.s32.totalorder %s198, %s201
      %p207 = scmp.eq.s32.totalorder %s15, 0
      %p208 = por %p206, %p207
      %p209 = scmp.ne.s32.totalorder %s198, %s201
      %p210 = scmp.eq.s32.totalorder %s20, 1
      %p211 = por %p209, %p210
      %p212 = scmp.ne.s32.totalorder %s201, %s202
      %p213 = scmp.eq.s32.totalorder %s20, 0
      %p214 = por %p212, %p213
      %p215 = scmp.ne.s32.totalorder %s201, %s202
      %p216 = scmp.eq.s32.totalorder %s21, 1
      %p217 = por %p215, %p216
      %p219 = scmp.ne.s32.totalorder %s202, %s218
      %p220 = scmp.eq.s32.totalorder %s21, 0
      %p221 = por %p219, %p220
      %p222 = scmp.le.s32.totalorder 1, %s15
      %p223 = scmp.lt.s32.totalorder %s15, 3
      %p224 = pnand %p222, %p223
      %p225 = pneg %p224
      // Predicated region
      $region9: #{tpu_custom_call.1} parent=5 // pred_check
        _
      $region10: #{tpu_custom_call.1} parent=5 // pred_check_branch
        %227 = sbr.rel (%p224) target = $region12
      $region11: #{tpu_custom_call.1} parent=5 // pred_region
        %s228 = ssub.s32 %s15, 1
        // Predicated region
        $region13: #{tpu_custom_call.1} parent=11 // pred_check
          %p229 = pneg %p62
        $region14: #{tpu_custom_call.1} parent=11 // pred_check_branch
          %231 = sbr.rel (%p229) target = $region16
        $region15: #{tpu_custom_call.1} parent=11 // pred_region
          _
        $region16: #{tpu_custom_call.1} parent=11 // pred_fallthru
          _
        // Predicated region
        $region17: #{tpu_custom_call.1} parent=11 // pred_check
          %p232 = pneg %p83
        $region18: #{tpu_custom_call.1} parent=11 // pred_check_branch
          %234 = sbr.rel (%p232) target = $region20
        $region19: #{tpu_custom_call.1} parent=11 // pred_region
          _
        $region20: #{tpu_custom_call.1} parent=11 // pred_fallthru
          _
        // Predicated region
        $region21: #{tpu_custom_call.1} parent=11 // pred_check
          %p235 = pneg %p104
        $region22: #{tpu_custom_call.1} parent=11 // pred_check_branch
          %237 = sbr.rel (%p235) target = $region24
        $region23: #{tpu_custom_call.1} parent=11 // pred_region
          _
        $region24: #{tpu_custom_call.1} parent=11 // pred_fallthru
          _
        // Predicated region
        $region25: #{tpu_custom_call.1} parent=11 // pred_check
          %p238 = pneg %p125
        $region26: #{tpu_custom_call.1} parent=11 // pred_check_branch
          %240 = sbr.rel (%p238) target = $region28
        $region27: #{tpu_custom_call.1} parent=11 // pred_region
          %s242 = ssub.s32 12288, 12288
          %243 = vsyncadd [#allocation3], %s242
          %s244 = sshll.u32 [#allocation2], 4
          %s245 = int_to_ptr.vmem [resolvable:$true] %s244
          %250 = dma.hbm_to_vmem [thread:$0]  %s4, 12288, %s245, [#allocation3], 384, 384, 24
        $region28: #{tpu_custom_call.1} parent=11 // pred_fallthru
          _
        // Predicated region
        $region29: #{tpu_custom_call.1} parent=11 // pred_check
          %p251 = pneg %p146
        $region30: #{tpu_custom_call.1} parent=11 // pred_check_branch
          %253 = sbr.rel (%p251) target = $region32
        $region31: #{tpu_custom_call.1} parent=11 // pred_region
          _
        $region32: #{tpu_custom_call.1} parent=11 // pred_fallthru
          _
        // Predicated region
        $region33: #{tpu_custom_call.1} parent=11 // pred_check
          %p254 = pneg %p167
        $region34: #{tpu_custom_call.1} parent=11 // pred_check_branch
          %256 = sbr.rel (%p254) target = $region36
        $region35: #{tpu_custom_call.1} parent=11 // pred_region
          _
        $region36: #{tpu_custom_call.1} parent=11 // pred_fallthru
          _
        // Predicated region
        $region37: #{tpu_custom_call.1} parent=11 // pred_check
          %p257 = pneg %p188
        $region38: #{tpu_custom_call.1} parent=11 // pred_check_branch
          %259 = sbr.rel (%p257) target = $region40
        $region39: #{tpu_custom_call.1} parent=11 // pred_region
          _
        $region40: #{tpu_custom_call.1} parent=11 // pred_fallthru
          _
      $region12: #{tpu_custom_call.1} parent=5 // pred_fallthru
        _
      %p260 = scmp.lt.s32.totalorder %s15, 2
      // Predicated region
      $region41: #{tpu_custom_call.1} parent=5 // pred_check
        %p261 = pneg %p260
      $region42: #{tpu_custom_call.1} parent=5 // pred_check_branch
        %263 = sbr.rel (%p261) target = $region44
      $region43: #{tpu_custom_call.1} parent=5 // pred_region
        // Predicated region
        $region45: #{tpu_custom_call.1} parent=43 // pred_check
          %p264 = pneg %p35
        $region46: #{tpu_custom_call.1} parent=43 // pred_check_branch
          %266 = sbr.rel (%p264) target = $region48
        $region47: #{tpu_custom_call.1} parent=43 // pred_region
          %s267 = smul.u32 4, %s15
          %p268 = scmp.lt.s32.totalorder %s267, 7
          %s269 = scalar_select %p268, %s267, 7
          %s270 = smul.addr %s269, 8
          %s271 = scalar_lea.vmem %s0, %s270
          %s272 = smul.u32 4, %s15
        $region48: #{tpu_custom_call.1} parent=43 // pred_fallthru
          _
      $region44: #{tpu_custom_call.1} parent=5 // pred_fallthru
        _
      %p273 = scmp.le.s32.totalorder 1, %s15
      %p274 = scmp.lt.s32.totalorder %s15, 3
      %p275 = pnand %p273, %p274
      %p276 = pneg %p275
      // Predicated region
      $region49: #{tpu_custom_call.1} parent=5 // pred_check
        _
      $region50: #{tpu_custom_call.1} parent=5 // pred_check_branch
        %278 = sbr.rel (%p275) target = $region52
      $region51: #{tpu_custom_call.1} parent=5 // pred_region
        %s279 = ssub.s32 %s15, 1
        // Predicated region
        $region53: #{tpu_custom_call.1} parent=51 // pred_check
          %p280 = pneg %p125
        $region54: #{tpu_custom_call.1} parent=51 // pred_check_branch
          %282 = sbr.rel (%p280) target = $region56
        $region55: #{tpu_custom_call.1} parent=51 // pred_region
          %283 = dma.done [#allocation3], 12288
        $region56: #{tpu_custom_call.1} parent=51 // pred_fallthru
          _
        %s284 = smul.u32 4, %s20
        %p285 = scmp.lt.s32.totalorder %s284, 7
        %s286 = scalar_select %p285, %s284, 7
        %s287 = smul.addr %s286, 8
        %s288 = scalar_lea.vmem %s0, %s287
        %p289 = pneg %p41
        %p290 = pneg %p38
        %p291 = pneg %p62
        %p292 = pneg %p59
        %p293 = pneg %p83
        %p294 = pneg %p80
        %p295 = pneg %p104
        %p296 = pneg %p101
        %p297 = pneg %p125
        %p298 = pneg %p122
        %p299 = pneg %p146
        %p300 = pneg %p143
        %p301 = pneg %p167
        %p302 = pneg %p164
        %p303 = pneg %p188
        %p304 = pneg %p185
        %p305 = pneg %p214
        %p306 = pneg %p211
        %s307 = smul.u32 2, %s20
        %p308 = scmp.lt.s32.totalorder %s307, 3
        %s309 = scalar_select %p308, %s307, 3
        %s310 = smul.addr %s309, 8
        %s311 = scalar_lea.vmem %s8, %s310
        %s312 = smul.u32 4, %s20
        %p313 = scmp.lt.s32.totalorder %s312, 7
        %s314 = scalar_select %p313, %s312, 7
        %s315 = smul.addr %s314, 8
        %s316 = scalar_lea.vmem %s0, %s315
        %s317 = smul.u32 4, %s20
        %s318 = smul.u32 2, %s20
        %p319 = scmp.lt.s32.totalorder %s318, 3
        %s320 = scalar_select %p319, %s318, 3
        %s321 = smul.addr %s320, 8
        %s322 = scalar_lea.vmem %s8, %s321
        %s323 = smul.u32 2, %s20
        %v324 = vld [vmem:[%s316] sm:$0xff]
        %v325 = vld [vmem:[%s316 + $0x8] sm:$0xff]
        %v326 = vld [vmem:[%s316 + $0x10] sm:$0xff]
        %v327 = vld [vmem:[%s316 + $0x18] sm:$0xff]
        %v328 = vld [vmem:[%s1] sm:$0xf]
        %vm329 = vcmask 31744
        %v331 = vsel %vm329, %v324, 0
        %v334 = vsel %vm329, %v325, 0
        %v337 = vsel %vm329, %v326, 0
        %v340 = vsel %vm329, %v327, 0
        %vm342 = vcmask 1043456
        %v344 = vsel %vm342, %v328, 0
        %346 = vmatprep.subr.mxu0 0.0
        %347 = vmatpush1.msra.mxu0 %v344
        %348 = vmatprep.subr.mxu0 0.0
        %349 = vmatpush1.msra.mxu0 0.0
        %350 = vmatprep.subr.mxu0 0.0
        %351 = vmatpush1.msra.mxu0 0.0
        %352 = vmatprep.subr.mxu0 0.0
        %353 = vmatpush1.msra.mxu0 0.0
        %354 = vmatprep.subr.mxu0 0.0
        %355 = vmatpush1.msra.mxu0 0.0
        %356 = vmatprep.subr.mxu0 0.0
        %357 = vmatpush1.msra.mxu0 0.0
        %358 = vmatprep.subr.mxu0 0.0
        %359 = vmatpush1.msra.mxu0 0.0
        %360 = vmatprep.subr.mxu0 0.0
        %361 = vmatpush1.msra.mxu0 0.0
        %362 = vmatprep.subr.mxu0 0.0
        %363 = vmatpush1.msra.mxu0 0.0
        %364 = vmatprep.subr.mxu0 0.0
        %365 = vmatpush1.msra.mxu0 0.0
        %366 = vmatprep.subr.mxu0 0.0
        %367 = vmatpush1.msra.mxu0 0.0
        %368 = vmatprep.subr.mxu0 0.0
        %369 = vmatpush1.msra.mxu0 0.0
        %370 = vmatprep.subr.mxu0 0.0
        %371 = vmatpush1.msra.mxu0 0.0
        %372 = vmatprep.subr.mxu0 0.0
        %373 = vmatpush1.msra.mxu0 0.0
        %374 = vmatprep.subr.mxu0 0.0
        %375 = vmatpush1.msra.mxu0 0.0
        %376 = vmatprep.subr.mxu0 0.0
        %377 = vmatpush1.msra.mxu0 0.0
        %378 = vmatprep.subr.mxu0 0.0
        %379 = vmatpush1.msra.mxu0 0.0
        %380 = vmatprep.subr.mxu0 0.0
        %381 = vmatpush1.msra.mxu0 0.0
        %382 = vmatprep.subr.mxu0 0.0
        %383 = vmatpush1.msra.mxu0 0.0
        %384 = vmatprep.subr.mxu0 0.0
        %385 = vmatpush1.msra.mxu0 0.0
        %386 = vmatprep.subr.mxu0 0.0
        %387 = vmatpush1.msra.mxu0 0.0
        %388 = vmatprep.subr.mxu0 0.0
        %389 = vmatpush1.msra.mxu0 0.0
        %390 = vmatprep.subr.mxu0 0.0
        %391 = vmatpush1.msra.mxu0 0.0
        %392 = vmatprep.subr.mxu0 0.0
        %393 = vmatpush1.msra.mxu0 0.0
        %394 = vmatprep.subr.mxu0 0.0
        %395 = vmatpush1.msra.mxu0 0.0
        %396 = vmatprep.subr.mxu0 0.0
        %397 = vmatpush1.msra.mxu0 0.0
        %398 = vmatprep.subr.mxu0 0.0
        %399 = vmatpush1.msra.mxu0 0.0
        %400 = vmatprep.subr.mxu0 0.0
        %401 = vmatpush1.msra.mxu0 0.0
        %402 = vmatprep.subr.mxu0 0.0
        %403 = vmatpush1.msra.mxu0 0.0
        %404 = vmatprep.subr.mxu0 0.0
        %405 = vmatpush1.msra.mxu0 0.0
        %406 = vmatprep.subr.mxu0 0.0
        %407 = vmatpush1.msra.mxu0 0.0
        %408 = vmatprep.subr.mxu0 0.0
        %409 = vmatpush1.msra.mxu0 0.0
        %410 = vmatprep.mubr.f32.mxu0 0.0
        %411 = vmatmul.mubr.f32.gmra.mrb[0].mxu0 %v331
        %v412 = vpop.f32.mrb[0].mxu0
        %v413 = vadd.f32 0.0, %v412
        %v414 = vpop.f32.mrb[0].mxu0
        %415 = vmatprep.mubr.f32.mxu0 0.0
        %416 = vmatmul.mubr.f32.gmra.mrb[0].mxu0 %v334
        %v417 = vpop.f32.mrb[0].mxu0
        %v418 = vadd.f32 0.0, %v417
        %v419 = vpop.f32.mrb[0].mxu0
        %420 = vmatprep.mubr.f32.mxu0 0.0
        %421 = vmatmul.mubr.f32.gmra.mrb[0].mxu0 %v337
        %v422 = vpop.f32.mrb[0].mxu0
        %v423 = vadd.f32 0.0, %v422
        %v424 = vpop.f32.mrb[0].mxu0
        %425 = vmatprep.mubr.f32.mxu0 0.0
        %426 = vmatmul.mubr.f32.gmra.mrb[0].mxu0 %v340
        %v427 = vpop.f32.mrb[0].mxu0
        %v428 = vadd.f32 0.0, %v427
        %v429 = vpop.f32.mrb[0].mxu0
        %430 = vdwg.mxu0
        %v431 = vld [vmem:[%s2] sm:$0x1]
        %v433 = vlaneseq
        %v434 = vshrl.u32 %v433, 7
        %v435 = vsub.s32 0, %v434
        %v436 = vrot.slane %v431, %v435
        %v438 = vmul.f32 %v413, %v436
        %v439 = vmul.f32 %v418, %v436
        %v440 = vmul.f32 %v423, %v436
        %v441 = vmul.f32 %v428, %v436
        %v442 = vld [vmem:[%s3] sm:$0x1]
        %v444 = vlaneseq
        %v445 = vshrl.u32 %v444, 7
        %v446 = vsub.s32 0, %v445
        %v447 = vrot.slane %v442, %v446
        %v449 = vadd.f32 %v438, %v447
        %v450 = vadd.f32 %v439, %v447
        %v451 = vadd.f32 %v440, %v447
        %v452 = vadd.f32 %v441, %v447
        %v453 = vmax.f32 %v449, 0.0
        %v454 = vmax.f32 %v450, 0.0
        %v455 = vmax.f32 %v451, 0.0
        %v456 = vmax.f32 %v452, 0.0
        %v457 = vlaneseq
        %v458 = vshrl.u32 %v457, 7
        %v459 = vadd.s32 %v458, 8
        %v460 = vadd.s32 %v458, 16
        %v461 = vadd.s32 %v458, 24
        %vm462 = vcmp.lt.s32.totalorder %v458, 0
        %v463 = vsub.s32 0, %v458
        %v464 = vsel %vm462, %v463, %v458
        %v465 = vshrl.u32 %v464, 4
        %v466 = vand.u32 %v464, 15
        %v467 = vsub.s32 0, %v466
        %v468 = vsel %vm462, %v467, %v466
        %vm469 = vcmp.lt.s32.totalorder %v459, 0
        %v470 = vsub.s32 0, %v459
        %v471 = vsel %vm469, %v470, %v459
        %v472 = vshrl.u32 %v471, 4
        %v473 = vand.u32 %v471, 15
        %v474 = vsub.s32 0, %v473
        %v475 = vsel %vm469, %v474, %v473
        %vm476 = vcmp.lt.s32.totalorder %v460, 0
        %v477 = vsub.s32 0, %v460
        %v478 = vsel %vm476, %v477, %v460
        %v479 = vshrl.u32 %v478, 4
        %v480 = vand.u32 %v478, 15
        %v481 = vsub.s32 0, %v480
        %v482 = vsel %vm476, %v481, %v480
        %vm483 = vcmp.lt.s32.totalorder %v461, 0
        %v484 = vsub.s32 0, %v461
        %v485 = vsel %vm483, %v484, %v461
        %v486 = vshrl.u32 %v485, 4
        %v487 = vand.u32 %v485, 15
        %v488 = vsub.s32 0, %v487
        %v489 = vsel %vm483, %v488, %v487
        %vm490 = vcmp.ne.s32.totalorder %v468, 0
        %vm491 = vcmp.ne.s32.totalorder %v475, 0
        %vm492 = vcmp.ne.s32.totalorder %v482, 0
        %vm493 = vcmp.ne.s32.totalorder %v489, 0
        %vm494 = vcmp.lt.s32.totalorder %v468, 0
        %vm495 = vcmp.lt.s32.totalorder %v475, 0
        %vm496 = vcmp.lt.s32.totalorder %v482, 0
        %vm497 = vcmp.lt.s32.totalorder %v489, 0
        %vm498 = vmand %vm494, %vm490
        %vm499 = vmand %vm495, %vm491
        %vm500 = vmand %vm496, %vm492
        %vm501 = vmand %vm497, %vm493
        %v502 = vadd.s32 %v468, 16
        %v503 = vadd.s32 %v475, 16
        %v504 = vadd.s32 %v482, 16
        %v505 = vadd.s32 %v489, 16
        %v506 = vsel %vm498, %v502, %v468
        %v507 = vsel %vm499, %v503, %v475
        %v508 = vsel %vm500, %v504, %v482
        %v509 = vsel %vm501, %v505, %v489
        %vm510 = vcmp.ne.s32.totalorder %v506, 0
        %vm511 = vcmp.ne.s32.totalorder %v507, 0
        %vm512 = vcmp.ne.s32.totalorder %v508, 0
        %vm513 = vcmp.ne.s32.totalorder %v509, 0
        %vm514 = vcmp.ne.s32.totalorder %v506, 15
        %vm515 = vcmp.ne.s32.totalorder %v507, 15
        %vm516 = vcmp.ne.s32.totalorder %v508, 15
        %vm517 = vcmp.ne.s32.totalorder %v509, 15
        %v518 = vld [vmem:[#allocation2] sm:$0xff]
        %v519 = vld [vmem:[#allocation2 + $0x8] sm:$0xff]
        %v520 = vld [vmem:[#allocation2 + $0x10] sm:$0xff]
        %v521 = vld [vmem:[#allocation2 + $0x18] sm:$0xff]
        %v522 = vld [vmem:[#allocation2 + $0x20] sm:$0xff]
        %v523 = vld [vmem:[#allocation2 + $0x28] sm:$0xff]
        %v524 = vld [vmem:[#allocation2 + $0x30] sm:$0xff]
        %v525 = vld [vmem:[#allocation2 + $0x38] sm:$0xff]
        %v526 = vld [vmem:[#allocation2 + $0x40] sm:$0xff]
        %v527 = vld [vmem:[#allocation2 + $0x48] sm:$0xff]
        %v528 = vld [vmem:[#allocation2 + $0x50] sm:$0xff]
        %v529 = vld [vmem:[#allocation2 + $0x58] sm:$0xff]
        %v530 = vld [vmem:[#allocation2 + $0x60] sm:$0xff]
        %v531 = vld [vmem:[#allocation2 + $0x68] sm:$0xff]
        %v532 = vld [vmem:[#allocation2 + $0x70] sm:$0xff]
        %v533 = vld [vmem:[#allocation2 + $0x78] sm:$0xff]
        %v534 = vld [vmem:[#allocation2 + $0x80] sm:$0xff]
        %v535 = vld [vmem:[#allocation2 + $0x88] sm:$0xff]
        %v536 = vld [vmem:[#allocation2 + $0x90] sm:$0xff]
        %v537 = vld [vmem:[#allocation2 + $0x98] sm:$0xff]
        %v538 = vld [vmem:[#allocation2 + $0xa0] sm:$0xff]
        %v539 = vld [vmem:[#allocation2 + $0xa8] sm:$0xff]
        %v540 = vld [vmem:[#allocation2 + $0xb0] sm:$0xff]
        %v541 = vld [vmem:[#allocation2 + $0xb8] sm:$0xff]
        %v542 = vld [vmem:[#allocation2 + $0xc0] sm:$0xff]
        %v543 = vld [vmem:[#allocation2 + $0xc8] sm:$0xff]
        %v544 = vld [vmem:[#allocation2 + $0xd0] sm:$0xff]
        %v545 = vld [vmem:[#allocation2 + $0xd8] sm:$0xff]
        %v546 = vld [vmem:[#allocation2 + $0xe0] sm:$0xff]
        %v547 = vld [vmem:[#allocation2 + $0xe8] sm:$0xff]
        %v548 = vld [vmem:[#allocation2 + $0xf0] sm:$0xff]
        %v549 = vld [vmem:[#allocation2 + $0xf8] sm:$0xff]
        %v550 = vld [vmem:[#allocation2 + $0x100] sm:$0xff]
        %v551 = vld [vmem:[#allocation2 + $0x108] sm:$0xff]
        %v552 = vld [vmem:[#allocation2 + $0x110] sm:$0xff]
        %v553 = vld [vmem:[#allocation2 + $0x118] sm:$0xff]
        %v554 = vld [vmem:[#allocation2 + $0x120] sm:$0xff]
        %v555 = vld [vmem:[#allocation2 + $0x128] sm:$0xff]
        %v556 = vld [vmem:[#allocation2 + $0x130] sm:$0xff]
        %v557 = vld [vmem:[#allocation2 + $0x138] sm:$0xff]
        %v558 = vld [vmem:[#allocation2 + $0x140] sm:$0xff]
        %v559 = vld [vmem:[#allocation2 + $0x148] sm:$0xff]
        %v560 = vld [vmem:[#allocation2 + $0x150] sm:$0xff]
        %v561 = vld [vmem:[#allocation2 + $0x158] sm:$0xff]
        %v562 = vld [vmem:[#allocation2 + $0x160] sm:$0xff]
        %v563 = vld [vmem:[#allocation2 + $0x168] sm:$0xff]
        %v564 = vld [vmem:[#allocation2 + $0x170] sm:$0xff]
        %v565 = vld [vmem:[#allocation2 + $0x178] sm:$0xff]
        %566 = vmatprep.subr.mxu0 %v519
        %567 = vmatpush1.msra.mxu0 %v518
        %568 = vmatprep.subr.mxu0 %v522
        %569 = vmatpush1.msra.mxu0 %v521
        %570 = vmatprep.subr.mxu0 %v525
        %571 = vmatpush1.msra.mxu0 %v524
        %572 = vmatprep.subr.mxu0 %v528
        %573 = vmatpush1.msra.mxu0 %v527
        %574 = vmatprep.subr.mxu0 %v531
        %575 = vmatpush1.msra.mxu0 %v530
        %576 = vmatprep.subr.mxu0 %v534
        %577 = vmatpush1.msra.mxu0 %v533
        %578 = vmatprep.subr.mxu0 %v537
        %579 = vmatpush1.msra.mxu0 %v536
        %580 = vmatprep.subr.mxu0 %v540
        %581 = vmatpush1.msra.mxu0 %v539
        %582 = vmatprep.subr.mxu0 %v543
        %583 = vmatpush1.msra.mxu0 %v542
        %584 = vmatprep.subr.mxu0 %v546
        %585 = vmatpush1.msra.mxu0 %v545
        %586 = vmatprep.subr.mxu0 %v549
        %587 = vmatpush1.msra.mxu0 %v548
        %588 = vmatprep.subr.mxu0 %v552
        %589 = vmatpush1.msra.mxu0 %v551
        %590 = vmatprep.subr.mxu0 %v555
        %591 = vmatpush1.msra.mxu0 %v554
        %592 = vmatprep.subr.mxu0 %v558
        %593 = vmatpush1.msra.mxu0 %v557
        %594 = vmatprep.subr.mxu0 %v561
        %595 = vmatpush1.msra.mxu0 %v560
        %596 = vmatprep.subr.mxu0 %v564
        %597 = vmatpush1.msra.mxu0 %v563
        %598 = vmatprep.subr.mxu0 0.0
        %599 = vmatpush1.msra.mxu0 0.0
        %600 = vmatprep.subr.mxu0 0.0
        %601 = vmatpush1.msra.mxu0 0.0
        %602 = vmatprep.subr.mxu0 0.0
        %603 = vmatpush1.msra.mxu0 0.0
        %604 = vmatprep.subr.mxu0 0.0
        %605 = vmatpush1.msra.mxu0 0.0
        %606 = vmatprep.subr.mxu0 0.0
        %607 = vmatpush1.msra.mxu0 0.0
        %608 = vmatprep.subr.mxu0 0.0
        %609 = vmatpush1.msra.mxu0 0.0
        %610 = vmatprep.subr.mxu0 0.0
        %611 = vmatpush1.msra.mxu0 0.0
        %612 = vmatprep.subr.mxu0 0.0
        %613 = vmatpush1.msra.mxu0 0.0
        %614 = vmatprep.subr.mxu0 0.0
        %615 = vmatpush1.msra.mxu0 0.0
        %616 = vmatprep.subr.mxu0 0.0
        %617 = vmatpush1.msra.mxu0 0.0
        %618 = vmatprep.subr.mxu0 0.0
        %619 = vmatpush1.msra.mxu0 0.0
        %620 = vmatprep.subr.mxu0 0.0
        %621 = vmatpush1.msra.mxu0 0.0
        %622 = vmatprep.subr.mxu0 0.0
        %623 = vmatpush1.msra.mxu0 0.0
        %624 = vmatprep.subr.mxu0 0.0
        %625 = vmatpush1.msra.mxu0 0.0
        %626 = vmatprep.subr.mxu0 0.0
        %627 = vmatpush1.msra.mxu0 0.0
        %628 = vmatprep.subr.mxu0 0.0
        %629 = vmatpush1.msra.mxu0 0.0
        %630 = vmatprep.mubr.f32.mxu0 0.0
        %631 = vmatmul.mubr.f32.gmra.mrb[0].mxu0 %v453
        %v632 = vpop.f32.mrb[0].mxu0
        %v633 = vadd.f32 0.0, %v632
        %v634 = vpop.f32.mrb[0].mxu0
        %v635 = vadd.f32 0.0, %v634
        %636 = vmatprep.mubr.f32.mxu0 0.0
        %637 = vmatmul.mubr.f32.gmra.mrb[0].mxu0 %v454
        %v638 = vpop.f32.mrb[0].mxu0
        %v639 = vadd.f32 0.0, %v638
        %v640 = vpop.f32.mrb[0].mxu0
        %v641 = vadd.f32 0.0, %v640
        %642 = vmatprep.mubr.f32.mxu0 0.0
        %643 = vmatmul.mubr.f32.gmra.mrb[0].mxu0 %v455
        %v644 = vpop.f32.mrb[0].mxu0
        %v645 = vadd.f32 0.0, %v644
        %v646 = vpop.f32.mrb[0].mxu0
        %v647 = vadd.f32 0.0, %v646
        %648 = vmatprep.mubr.f32.mxu0 0.0
        %649 = vmatmul.mubr.f32.gmra.mrb[0].mxu0 %v456
        %v650 = vpop.f32.mrb[0].mxu0
        %v651 = vadd.f32 0.0, %v650
        %v652 = vpop.f32.mrb[0].mxu0
        %v653 = vadd.f32 0.0, %v652
        %654 = vdwg.mxu0
        %655 = vmatprep.subr.mxu0 0.0
        %656 = vmatpush1.msra.mxu0 %v520
        %657 = vmatprep.subr.mxu0 0.0
        %658 = vmatpush1.msra.mxu0 %v523
        %659 = vmatprep.subr.mxu0 0.0
        %660 = vmatpush1.msra.mxu0 %v526
        %661 = vmatprep.subr.mxu0 0.0
        %662 = vmatpush1.msra.mxu0 %v529
        %663 = vmatprep.subr.mxu0 0.0
        %664 = vmatpush1.msra.mxu0 %v532
        %665 = vmatprep.subr.mxu0 0.0
        %666 = vmatpush1.msra.mxu0 %v535
        %667 = vmatprep.subr.mxu0 0.0
        %668 = vmatpush1.msra.mxu0 %v538
        %669 = vmatprep.subr.mxu0 0.0
        %670 = vmatpush1.msra.mxu0 %v541
        %671 = vmatprep.subr.mxu0 0.0
        %672 = vmatpush1.msra.mxu0 %v544
        %673 = vmatprep.subr.mxu0 0.0
        %674 = vmatpush1.msra.mxu0 %v547
        %675 = vmatprep.subr.mxu0 0.0
        %676 = vmatpush1.msra.mxu0 %v550
        %677 = vmatprep.subr.mxu0 0.0
        %678 = vmatpush1.msra.mxu0 %v553
        %679 = vmatprep.subr.mxu0 0.0
        %680 = vmatpush1.msra.mxu0 %v556
        %681 = vmatprep.subr.mxu0 0.0
        %682 = vmatpush1.msra.mxu0 %v559
        %683 = vmatprep.subr.mxu0 0.0
        %684 = vmatpush1.msra.mxu0 %v562
        %685 = vmatprep.subr.mxu0 0.0
        %686 = vmatpush1.msra.mxu0 %v565
        %687 = vmatprep.subr.mxu0 0.0
        %688 = vmatpush1.msra.mxu0 0.0
        %689 = vmatprep.subr.mxu0 0.0
        %690 = vmatpush1.msra.mxu0 0.0
        %691 = vmatprep.subr.mxu0 0.0
        %692 = vmatpush1.msra.mxu0 0.0
        %693 = vmatprep.subr.mxu0 0.0
        %694 = vmatpush1.msra.mxu0 0.0
        %695 = vmatprep.subr.mxu0 0.0
        %696 = vmatpush1.msra.mxu0 0.0
        %697 = vmatprep.subr.mxu0 0.0
        %698 = vmatpush1.msra.mxu0 0.0
        %699 = vmatprep.subr.mxu0 0.0
        %700 = vmatpush1.msra.mxu0 0.0
        %701 = vmatprep.subr.mxu0 0.0
        %702 = vmatpush1.msra.mxu0 0.0
        %703 = vmatprep.subr.mxu0 0.0
        %704 = vmatpush1.msra.mxu0 0.0
        %705 = vmatprep.subr.mxu0 0.0
        %706 = vmatpush1.msra.mxu0 0.0
        %707 = vmatprep.subr.mxu0 0.0
        %708 = vmatpush1.msra.mxu0 0.0
        %709 = vmatprep.subr.mxu0 0.0
        %710 = vmatpush1.msra.mxu0 0.0
        %711 = vmatprep.subr.mxu0 0.0
        %712 = vmatpush1.msra.mxu0 0.0
        %713 = vmatprep.subr.mxu0 0.0
        %714 = vmatpush1.msra.mxu0 0.0
        %715 = vmatprep.subr.mxu0 0.0
        %716 = vmatpush1.msra.mxu0 0.0
        %717 = vmatprep.subr.mxu0 0.0
        %718 = vmatpush1.msra.mxu0 0.0
        %719 = vmatprep.mubr.f32.mxu0 0.0
        %720 = vmatmul.mubr.f32.gmra.mrb[0].mxu0 %v453
        %v721 = vpop.f32.mrb[0].mxu0
        %v722 = vadd.f32 0.0, %v721
        %v723 = vpop.f32.mrb[0].mxu0
        %724 = vmatprep.mubr.f32.mxu0 0.0
        %725 = vmatmul.mubr.f32.gmra.mrb[0].mxu0 %v454
        %v726 = vpop.f32.mrb[0].mxu0
        %v727 = vadd.f32 0.0, %v726
        %v728 = vpop.f32.mrb[0].mxu0
        %729 = vmatprep.mubr.f32.mxu0 0.0
        %730 = vmatmul.mubr.f32.gmra.mrb[0].mxu0 %v455
        %v731 = vpop.f32.mrb[0].mxu0
        %v732 = vadd.f32 0.0, %v731
        %v733 = vpop.f32.mrb[0].mxu0
        %734 = vmatprep.mubr.f32.mxu0 0.0
        %735 = vmatmul.mubr.f32.gmra.mrb[0].mxu0 %v456
        %v736 = vpop.f32.mrb[0].mxu0
        %v737 = vadd.f32 0.0, %v736
        %v738 = vpop.f32.mrb[0].mxu0
        %739 = vdwg.mxu0
        %v740 = vrot.slane %v633, 7
        %v741 = vrot.slane %v639, 7
        %v742 = vrot.slane %v645, 7
        %v743 = vrot.slane %v651, 7
        %vm744 = vcmp.lt.s32.totalorder %v458, 1
        %v745 = vsel %vm744, %v742, %v743
        %v746 = vsel %vm744, %v741, %v742
        %v747 = vsel %vm744, %v740, %v741
        %v748 = vsel %vm744, %v743, %v740
        %v749 = vsel %vm510, 1, 0
        %v750 = vsel %vm511, 1, 0
        %v751 = vsel %vm512, 1, 0
        %v752 = vsel %vm513, 1, 0
        %vm753 = vcmp.eq.s32.totalorder %v749, 1
        %vm754 = vcmp.eq.s32.totalorder %v750, 1
        %vm755 = vcmp.eq.s32.totalorder %v751, 1
        %vm756 = vcmp.eq.s32.totalorder %v752, 1
        %v757 = vsel %vm753, %v748, 0.0
        %v758 = vsel %vm754, %v747, 0.0
        %v759 = vsel %vm755, %v746, 0.0
        %v760 = vsel %vm756, %v745, 0.0
        %v761 = vrot.slane %v722, 1
        %v762 = vrot.slane %v727, 1
        %v763 = vrot.slane %v732, 1
        %v764 = vrot.slane %v737, 1
        %vm765 = vcmp.lt.s32.totalorder %v458, 7
        %v766 = vsel %vm765, %v763, %v764
        %v767 = vsel %vm765, %v762, %v763
        %v768 = vsel %vm765, %v761, %v762
        %v769 = vsel %vm765, %v764, %v761
        %v770 = vsel %vm514, 1, 0
        %v771 = vsel %vm515, 1, 0
        %v772 = vsel %vm516, 1, 0
        %v773 = vsel %vm517, 1, 0
        %vm774 = vcmp.eq.s32.totalorder %v770, 1
        %vm775 = vcmp.eq.s32.totalorder %v771, 1
        %vm776 = vcmp.eq.s32.totalorder %v772, 1
        %vm777 = vcmp.eq.s32.totalorder %v773, 1
        %v778 = vsel %vm774, %v768, 0.0
        %v779 = vsel %vm775, %v767, 0.0
        %v780 = vsel %vm776, %v766, 0.0
        %v781 = vsel %vm777, %v769, 0.0
        %v782 = vadd.f32 %v757, %v635
        %v783 = vadd.f32 %v758, %v641
        %v784 = vadd.f32 %v759, %v647
        %v785 = vadd.f32 %v760, %v653
        %v786 = vadd.f32 %v782, %v778
        %v787 = vadd.f32 %v783, %v779
        %v788 = vadd.f32 %v784, %v780
        %v789 = vadd.f32 %v785, %v781
        %v790 = vld [vmem:[%s5] sm:$0x1]
        %v792 = vlaneseq
        %v793 = vshrl.u32 %v792, 7
        %v794 = vsub.s32 0, %v793
        %v795 = vrot.slane %v790, %v794
        %v797 = vmul.f32 %v786, %v795
        %v798 = vmul.f32 %v787, %v795
        %v799 = vmul.f32 %v788, %v795
        %v800 = vmul.f32 %v789, %v795
        %v801 = vld [vmem:[%s6] sm:$0x1]
        %v803 = vlaneseq
        %v804 = vshrl.u32 %v803, 7
        %v805 = vsub.s32 0, %v804
        %v806 = vrot.slane %v801, %v805
        %v808 = vadd.f32 %v797, %v806
        %v809 = vadd.f32 %v798, %v806
        %v810 = vadd.f32 %v799, %v806
        %v811 = vadd.f32 %v800, %v806
        %v812 = vmax.f32 %v808, 0.0
        %v813 = vmax.f32 %v809, 0.0
        %v814 = vmax.f32 %v810, 0.0
        %v815 = vmax.f32 %v811, 0.0
        %v816 = vadd.f32 %v453, %v812
        %v817 = vadd.f32 %v454, %v813
        %v818 = vadd.f32 %v455, %v814
        %v819 = vadd.f32 %v456, %v815
        %s820 = scalar_lea.vmem [#allocation2], 384
        %v821 = vld [vmem:[%s820] sm:$0xff]
        %v822 = vld [vmem:[%s820 + $0x8] sm:$0xff]
        %v823 = vld [vmem:[%s820 + $0x10] sm:$0xff]
        %v824 = vld [vmem:[%s820 + $0x18] sm:$0xff]
        %v825 = vld [vmem:[%s820 + $0x20] sm:$0xff]
        %v826 = vld [vmem:[%s820 + $0x28] sm:$0xff]
        %v827 = vld [vmem:[%s820 + $0x30] sm:$0xff]
        %v828 = vld [vmem:[%s820 + $0x38] sm:$0xff]
        %v829 = vld [vmem:[%s820 + $0x40] sm:$0xff]
        %v830 = vld [vmem:[%s820 + $0x48] sm:$0xff]
        %v831 = vld [vmem:[%s820 + $0x50] sm:$0xff]
        %v832 = vld [vmem:[%s820 + $0x58] sm:$0xff]
        %v833 = vld [vmem:[%s820 + $0x60] sm:$0xff]
        %v834 = vld [vmem:[%s820 + $0x68] sm:$0xff]
        %v835 = vld [vmem:[%s820 + $0x70] sm:$0xff]
        %v836 = vld [vmem:[%s820 + $0x78] sm:$0xff]
        %v837 = vld [vmem:[%s820 + $0x80] sm:$0xff]
        %v838 = vld [vmem:[%s820 + $0x88] sm:$0xff]
        %v839 = vld [vmem:[%s820 + $0x90] sm:$0xff]
        %v840 = vld [vmem:[%s820 + $0x98] sm:$0xff]
        %v841 = vld [vmem:[%s820 + $0xa0] sm:$0xff]
        %v842 = vld [vmem:[%s820 + $0xa8] sm:$0xff]
        %v843 = vld [vmem:[%s820 + $0xb0] sm:$0xff]
        %v844 = vld [vmem:[%s820 + $0xb8] sm:$0xff]
        %v845 = vld [vmem:[%s820 + $0xc0] sm:$0xff]
        %v846 = vld [vmem:[%s820 + $0xc8] sm:$0xff]
        %v847 = vld [vmem:[%s820 + $0xd0] sm:$0xff]
        %v848 = vld [vmem:[%s820 + $0xd8] sm:$0xff]
        %v849 = vld [vmem:[%s820 + $0xe0] sm:$0xff]
        %v850 = vld [vmem:[%s820 + $0xe8] sm:$0xff]
        %v851 = vld [vmem:[%s820 + $0xf0] sm:$0xff]
        %v852 = vld [vmem:[%s820 + $0xf8] sm:$0xff]
        %v853 = vld [vmem:[%s820 + $0x100] sm:$0xff]
        %v854 = vld [vmem:[%s820 + $0x108] sm:$0xff]
        %v855 = vld [vmem:[%s820 + $0x110] sm:$0xff]
        %v856 = vld [vmem:[%s820 + $0x118] sm:$0xff]
        %v857 = vld [vmem:[%s820 + $0x120] sm:$0xff]
        %v858 = vld [vmem:[%s820 + $0x128] sm:$0xff]
        %v859 = vld [vmem:[%s820 + $0x130] sm:$0xff]
        %v860 = vld [vmem:[%s820 + $0x138] sm:$0xff]
        %v861 = vld [vmem:[%s820 + $0x140] sm:$0xff]
        %v862 = vld [vmem:[%s820 + $0x148] sm:$0xff]
        %v863 = vld [vmem:[%s820 + $0x150] sm:$0xff]
        %v864 = vld [vmem:[%s820 + $0x158] sm:$0xff]
        %v865 = vld [vmem:[%s820 + $0x160] sm:$0xff]
        %v866 = vld [vmem:[%s820 + $0x168] sm:$0xff]
        %v867 = vld [vmem:[%s820 + $0x170] sm:$0xff]
        %v868 = vld [vmem:[%s820 + $0x178] sm:$0xff]
        %869 = vmatprep.subr.mxu0 %v822
        %870 = vmatpush1.msra.mxu0 %v821
        %871 = vmatprep.subr.mxu0 %v825
        %872 = vmatpush1.msra.mxu0 %v824
        %873 = vmatprep.subr.mxu0 %v828
        %874 = vmatpush1.msra.mxu0 %v827
        %875 = vmatprep.subr.mxu0 %v831
        %876 = vmatpush1.msra.mxu0 %v830
        %877 = vmatprep.subr.mxu0 %v834
        %878 = vmatpush1.msra.mxu0 %v833
        %879 = vmatprep.subr.mxu0 %v837
        %880 = vmatpush1.msra.mxu0 %v836
        %881 = vmatprep.subr.mxu0 %v840
        %882 = vmatpush1.msra.mxu0 %v839
        %883 = vmatprep.subr.mxu0 %v843
        %884 = vmatpush1.msra.mxu0 %v842
        %885 = vmatprep.subr.mxu0 %v846
        %886 = vmatpush1.msra.mxu0 %v845
        %887 = vmatprep.subr.mxu0 %v849
        %888 = vmatpush1.msra.mxu0 %v848
        %889 = vmatprep.subr.mxu0 %v852
        %890 = vmatpush1.msra.mxu0 %v851
        %891 = vmatprep.subr.mxu0 %v855
        %892 = vmatpush1.msra.mxu0 %v854
        %893 = vmatprep.subr.mxu0 %v858
        %894 = vmatpush1.msra.mxu0 %v857
        %895 = vmatprep.subr.mxu0 %v861
        %896 = vmatpush1.msra.mxu0 %v860
        %897 = vmatprep.subr.mxu0 %v864
        %898 = vmatpush1.msra.mxu0 %v863
        %899 = vmatprep.subr.mxu0 %v867
        %900 = vmatpush1.msra.mxu0 %v866
        %901 = vmatprep.subr.mxu0 0.0
        %902 = vmatpush1.msra.mxu0 0.0
        %903 = vmatprep.subr.mxu0 0.0
        %904 = vmatpush1.msra.mxu0 0.0
        %905 = vmatprep.subr.mxu0 0.0
        %906 = vmatpush1.msra.mxu0 0.0
        %907 = vmatprep.subr.mxu0 0.0
        %908 = vmatpush1.msra.mxu0 0.0
        %909 = vmatprep.subr.mxu0 0.0
        %910 = vmatpush1.msra.mxu0 0.0
        %911 = vmatprep.subr.mxu0 0.0
        %912 = vmatpush1.msra.mxu0 0.0
        %913 = vmatprep.subr.mxu0 0.0
        %914 = vmatpush1.msra.mxu0 0.0
        %915 = vmatprep.subr.mxu0 0.0
        %916 = vmatpush1.msra.mxu0 0.0
        %917 = vmatprep.subr.mxu0 0.0
        %918 = vmatpush1.msra.mxu0 0.0
        %919 = vmatprep.subr.mxu0 0.0
        %920 = vmatpush1.msra.mxu0 0.0
        %921 = vmatprep.subr.mxu0 0.0
        %922 = vmatpush1.msra.mxu0 0.0
        %923 = vmatprep.subr.mxu0 0.0
        %924 = vmatpush1.msra.mxu0 0.0
        %925 = vmatprep.subr.mxu0 0.0
        %926 = vmatpush1.msra.mxu0 0.0
        %927 = vmatprep.subr.mxu0 0.0
        %928 = vmatpush1.msra.mxu0 0.0
        %929 = vmatprep.subr.mxu0 0.0
        %930 = vmatpush1.msra.mxu0 0.0
        %931 = vmatprep.subr.mxu0 0.0
        %932 = vmatpush1.msra.mxu0 0.0
        %933 = vmatprep.mubr.f32.mxu0 0.0
        %934 = vmatmul.mubr.f32.gmra.mrb[0].mxu0 %v816
        %v935 = vpop.f32.mrb[0].mxu0
        %v936 = vadd.f32 0.0, %v935
        %v937 = vpop.f32.mrb[0].mxu0
        %v938 = vadd.f32 0.0, %v937
        %939 = vmatprep.mubr.f32.mxu0 0.0
        %940 = vmatmul.mubr.f32.gmra.mrb[0].mxu0 %v817
        %v941 = vpop.f32.mrb[0].mxu0
        %v942 = vadd.f32 0.0, %v941
        %v943 = vpop.f32.mrb[0].mxu0
        %v944 = vadd.f32 0.0, %v943
        %945 = vmatprep.mubr.f32.mxu0 0.0
        %946 = vmatmul.mubr.f32.gmra.mrb[0].mxu0 %v818
        %v947 = vpop.f32.mrb[0].mxu0
        %v948 = vadd.f32 0.0, %v947
        %v949 = vpop.f32.mrb[0].mxu0
        %v950 = vadd.f32 0.0, %v949
        %951 = vmatprep.mubr.f32.mxu0 0.0
        %952 = vmatmul.mubr.f32.gmra.mrb[0].mxu0 %v819
        %v953 = vpop.f32.mrb[0].mxu0
        %v954 = vadd.f32 0.0, %v953
        %v955 = vpop.f32.mrb[0].mxu0
        %v956 = vadd.f32 0.0, %v955
        %957 = vdwg.mxu0
        %958 = vmatprep.subr.mxu0 0.0
        %959 = vmatpush1.msra.mxu0 %v823
        %960 = vmatprep.subr.mxu0 0.0
        %961 = vmatpush1.msra.mxu0 %v826
        %962 = vmatprep.subr.mxu0 0.0
        %963 = vmatpush1.msra.mxu0 %v829
        %964 = vmatprep.subr.mxu0 0.0
        %965 = vmatpush1.msra.mxu0 %v832
        %966 = vmatprep.subr.mxu0 0.0
        %967 = vmatpush1.msra.mxu0 %v835
        %968 = vmatprep.subr.mxu0 0.0
        %969 = vmatpush1.msra.mxu0 %v838
        %970 = vmatprep.subr.mxu0 0.0
        %971 = vmatpush1.msra.mxu0 %v841
        %972 = vmatprep.subr.mxu0 0.0
        %973 = vmatpush1.msra.mxu0 %v844
        %974 = vmatprep.subr.mxu0 0.0
        %975 = vmatpush1.msra.mxu0 %v847
        %976 = vmatprep.subr.mxu0 0.0
        %977 = vmatpush1.msra.mxu0 %v850
        %978 = vmatprep.subr.mxu0 0.0
        %979 = vmatpush1.msra.mxu0 %v853
        %980 = vmatprep.subr.mxu0 0.0
        %981 = vmatpush1.msra.mxu0 %v856
        %982 = vmatprep.subr.mxu0 0.0
        %983 = vmatpush1.msra.mxu0 %v859
        %984 = vmatprep.subr.mxu0 0.0
        %985 = vmatpush1.msra.mxu0 %v862
        %986 = vmatprep.subr.mxu0 0.0
        %987 = vmatpush1.msra.mxu0 %v865
        %988 = vmatprep.subr.mxu0 0.0
        %989 = vmatpush1.msra.mxu0 %v868
        %990 = vmatprep.subr.mxu0 0.0
        %991 = vmatpush1.msra.mxu0 0.0
        %992 = vmatprep.subr.mxu0 0.0
        %993 = vmatpush1.msra.mxu0 0.0
        %994 = vmatprep.subr.mxu0 0.0
        %995 = vmatpush1.msra.mxu0 0.0
        %996 = vmatprep.subr.mxu0 0.0
        %997 = vmatpush1.msra.mxu0 0.0
        %998 = vmatprep.subr.mxu0 0.0
        %999 = vmatpush1.msra.mxu0 0.0
        %1000 = vmatprep.subr.mxu0 0.0
        %1001 = vmatpush1.msra.mxu0 0.0
        %1002 = vmatprep.subr.mxu0 0.0
        %1003 = vmatpush1.msra.mxu0 0.0
        %1004 = vmatprep.subr.mxu0 0.0
        %1005 = vmatpush1.msra.mxu0 0.0
        %1006 = vmatprep.subr.mxu0 0.0
        %1007 = vmatpush1.msra.mxu0 0.0
        %1008 = vmatprep.subr.mxu0 0.0
        %1009 = vmatpush1.msra.mxu0 0.0
        %1010 = vmatprep.subr.mxu0 0.0
        %1011 = vmatpush1.msra.mxu0 0.0
        %1012 = vmatprep.subr.mxu0 0.0
        %1013 = vmatpush1.msra.mxu0 0.0
        %1014 = vmatprep.subr.mxu0 0.0
        %1015 = vmatpush1.msra.mxu0 0.0
        %1016 = vmatprep.subr.mxu0 0.0
        %1017 = vmatpush1.msra.mxu0 0.0
        %1018 = vmatprep.subr.mxu0 0.0
        %1019 = vmatpush1.msra.mxu0 0.0
        %1020 = vmatprep.subr.mxu0 0.0
        %1021 = vmatpush1.msra.mxu0 0.0
        %1022 = vmatprep.mubr.f32.mxu0 0.0
        %1023 = vmatmul.mubr.f32.gmra.mrb[0].mxu0 %v816
        %v1024 = vpop.f32.mrb[0].mxu0
        %v1025 = vadd.f32 0.0, %v1024
        %v1026 = vpop.f32.mrb[0].mxu0
        %1027 = vmatprep.mubr.f32.mxu0 0.0
        %1028 = vmatmul.mubr.f32.gmra.mrb[0].mxu0 %v817
        %v1029 = vpop.f32.mrb[0].mxu0
        %v1030 = vadd.f32 0.0, %v1029
        %v1031 = vpop.f32.mrb[0].mxu0
        %1032 = vmatprep.mubr.f32.mxu0 0.0
        %1033 = vmatmul.mubr.f32.gmra.mrb[0].mxu0 %v818
        %v1034 = vpop.f32.mrb[0].mxu0
        %v1035 = vadd.f32 0.0, %v1034
        %v1036 = vpop.f32.mrb[0].mxu0
        %1037 = vmatprep.mubr.f32.mxu0 0.0
        %1038 = vmatmul.mubr.f32.gmra.mrb[0].mxu0 %v819
        %v1039 = vpop.f32.mrb[0].mxu0
        %v1040 = vadd.f32 0.0, %v1039
        %v1041 = vpop.f32.mrb[0].mxu0
        %1042 = vdwg.mxu0
        %v1043 = vrot.slane %v936, 7
        %v1044 = vrot.slane %v942, 7
        %v1045 = vrot.slane %v948, 7
        %v1046 = vrot.slane %v954, 7
        %v1047 = vsel %vm744, %v1045, %v1046
        %v1048 = vsel %vm744, %v1044, %v1045
        %v1049 = vsel %vm744, %v1043, %v1044
        %v1050 = vsel %vm744, %v1046, %v1043
        %v1051 = vsel %vm753, %v1050, 0.0
        %v1052 = vsel %vm754, %v1049, 0.0
        %v1053 = vsel %vm755, %v1048, 0.0
        %v1054 = vsel %vm756, %v1047, 0.0
        %v1055 = vrot.slane %v1025, 1
        %v1056 = vrot.slane %v1030, 1
        %v1057 = vrot.slane %v1035, 1
        %v1058 = vrot.slane %v1040, 1
        %v1059 = vsel %vm765, %v1057, %v1058
        %v1060 = vsel %vm765, %v1056, %v1057
        %v1061 = vsel %vm765, %v1055, %v1056
        %v1062 = vsel %vm765, %v1058, %v1055
        %v1063 = vsel %vm774, %v1061, 0.0
        %v1064 = vsel %vm775, %v1060, 0.0
        %v1065 = vsel %vm776, %v1059, 0.0
        %v1066 = vsel %vm777, %v1062, 0.0
        %v1067 = vadd.f32 %v1051, %v938
        %v1068 = vadd.f32 %v1052, %v944
        %v1069 = vadd.f32 %v1053, %v950
        %v1070 = vadd.f32 %v1054, %v956
        %v1071 = vadd.f32 %v1067, %v1063
        %v1072 = vadd.f32 %v1068, %v1064
        %v1073 = vadd.f32 %v1069, %v1065
        %v1074 = vadd.f32 %v1070, %v1066
        %s1075 = scalar_lea.vmem %s5, 1
        %v1076 = vld [vmem:[%s1075] sm:$0x1]
        %v1078 = vlaneseq
        %v1079 = vshrl.u32 %v1078, 7
        %v1080 = vsub.s32 0, %v1079
        %v1081 = vrot.slane %v1076, %v1080
        %v1083 = vmul.f32 %v1071, %v1081
        %v1084 = vmul.f32 %v1072, %v1081
        %v1085 = vmul.f32 %v1073, %v1081
        %v1086 = vmul.f32 %v1074, %v1081
        %s1087 = scalar_lea.vmem %s6, 1
        %v1088 = vld [vmem:[%s1087] sm:$0x1]
        %v1090 = vlaneseq
        %v1091 = vshrl.u32 %v1090, 7
        %v1092 = vsub.s32 0, %v1091
        %v1093 = vrot.slane %v1088, %v1092
        %v1095 = vadd.f32 %v1083, %v1093
        %v1096 = vadd.f32 %v1084, %v1093
        %v1097 = vadd.f32 %v1085, %v1093
        %v1098 = vadd.f32 %v1086, %v1093
        %v1099 = vmax.f32 %v1095, 0.0
        %v1100 = vmax.f32 %v1096, 0.0
        %v1101 = vmax.f32 %v1097, 0.0
        %v1102 = vmax.f32 %v1098, 0.0
        %v1103 = vadd.f32 %v816, %v1099
        %v1104 = vadd.f32 %v817, %v1100
        %v1105 = vadd.f32 %v818, %v1101
        %v1106 = vadd.f32 %v819, %v1102
        %v1107 = vld [vmem:[%s7] sm:$0x3f]
        %1108 = vmatprep.subr.mxu0 0.0
        %1109 = vmatpush1.xpose.msra.mxu0 %v1103
        %1110 = vmatprep.subr.mxu0 0.0
        %1111 = vmatpush1.xpose.msra.mxu0 %v1104
        %1112 = vmatprep.subr.mxu0 0.0
        %1113 = vmatpush1.xpose.msra.mxu0 0.0
        %1114 = vmatprep.subr.mxu0 0.0
        %1115 = vmatpush1.xpose.msra.mxu0 0.0
        %1116 = vmatprep.subr.mxu0 0.0
        %1117 = vmatpush1.xpose.msra.mxu0 0.0
        %1118 = vmatprep.subr.mxu0 0.0
        %1119 = vmatpush1.xpose.msra.mxu0 0.0
        %1120 = vmatprep.subr.mxu0 0.0
        %1121 = vmatpush1.xpose.msra.mxu0 0.0
        %1122 = vmatprep.subr.mxu0 0.0
        %1123 = vmatpush1.xpose.msra.mxu0 0.0
        %1124 = vmatprep.subr.mxu0 0.0
        %1125 = vmatpush1.xpose.msra.mxu0 0.0
        %1126 = vmatprep.subr.mxu0 0.0
        %1127 = vmatpush1.xpose.msra.mxu0 0.0
        %1128 = vmatprep.subr.mxu0 0.0
        %1129 = vmatpush1.xpose.msra.mxu0 0.0
        %1130 = vmatprep.subr.mxu0 0.0
        %1131 = vmatpush1.xpose.msra.mxu0 0.0
        %1132 = vmatprep.subr.mxu0 0.0
        %1133 = vmatpush1.xpose.msra.mxu0 0.0
        %1134 = vmatprep.subr.mxu0 0.0
        %1135 = vmatpush1.xpose.msra.mxu0 0.0
        %1136 = vmatprep.subr.mxu0 0.0
        %1137 = vmatpush1.xpose.msra.mxu0 0.0
        %1138 = vmatprep.subr.mxu0 0.0
        %1139 = vmatpush1.xpose.msra.mxu0 0.0
        %1140 = vmatprep.subr.mxu0 0.0
        %1141 = vmatpush1.xpose.msra.mxu0 0.0
        %1142 = vmatprep.subr.mxu0 0.0
        %1143 = vmatpush1.xpose.msra.mxu0 0.0
        %1144 = vmatprep.subr.mxu0 0.0
        %1145 = vmatpush1.xpose.msra.mxu0 0.0
        %1146 = vmatprep.subr.mxu0 0.0
        %1147 = vmatpush1.xpose.msra.mxu0 0.0
        %1148 = vmatprep.subr.mxu0 0.0
        %1149 = vmatpush1.xpose.msra.mxu0 0.0
        %1150 = vmatprep.subr.mxu0 0.0
        %1151 = vmatpush1.xpose.msra.mxu0 0.0
        %1152 = vmatprep.subr.mxu0 0.0
        %1153 = vmatpush1.xpose.msra.mxu0 0.0
        %1154 = vmatprep.subr.mxu0 0.0
        %1155 = vmatpush1.xpose.msra.mxu0 0.0
        %1156 = vmatprep.subr.mxu0 0.0
        %1157 = vmatpush1.xpose.msra.mxu0 0.0
        %1158 = vmatprep.subr.mxu0 0.0
        %1159 = vmatpush1.xpose.msra.mxu0 0.0
        %1160 = vmatprep.subr.mxu0 0.0
        %1161 = vmatpush1.xpose.msra.mxu0 0.0
        %1162 = vmatprep.subr.mxu0 0.0
        %1163 = vmatpush1.xpose.msra.mxu0 0.0
        %1164 = vmatprep.subr.mxu0 0.0
        %1165 = vmatpush1.xpose.msra.mxu0 0.0
        %1166 = vmatprep.subr.mxu0 0.0
        %1167 = vmatpush1.xpose.msra.mxu0 0.0
        %1168 = vmatprep.subr.mxu0 0.0
        %1169 = vmatpush1.xpose.msra.mxu0 0.0
        %1170 = vmatprep.subr.mxu0 0.0
        %1171 = vmatpush1.xpose.msra.mxu0 0.0
        %1172 = vmatprep.mubr.f32.mxu0 0.0
        %1173 = vmatmul.mubr.f32.gmra.mrb[0].mxu0 %v1107
        %v1174 = vpop.f32.mrb[0].mxu0
        %v1175 = vadd.f32 0.0, %v1174
        %v1176 = vpop.f32.mrb[0].mxu0
        %1177 = vdwg.mxu0
        %vm1178 = vcmask 128000
        %1179 = vst.msk [vmem:[%s322] sm:$0x3f] %vm1178, %v1175
        %1180 = vmatprep.subr.mxu0 0.0
        %1181 = vmatpush1.xpose.msra.mxu0 %v1105
        %1182 = vmatprep.subr.mxu0 0.0
        %1183 = vmatpush1.xpose.msra.mxu0 %v1106
        %1184 = vmatprep.subr.mxu0 0.0
        %1185 = vmatpush1.xpose.msra.mxu0 0.0
        %1186 = vmatprep.subr.mxu0 0.0
        %1187 = vmatpush1.xpose.msra.mxu0 0.0
        %1188 = vmatprep.subr.mxu0 0.0
        %1189 = vmatpush1.xpose.msra.mxu0 0.0
        %1190 = vmatprep.subr.mxu0 0.0
        %1191 = vmatpush1.xpose.msra.mxu0 0.0
        %1192 = vmatprep.subr.mxu0 0.0
        %1193 = vmatpush1.xpose.msra.mxu0 0.0
        %1194 = vmatprep.subr.mxu0 0.0
        %1195 = vmatpush1.xpose.msra.mxu0 0.0
        %1196 = vmatprep.subr.mxu0 0.0
        %1197 = vmatpush1.xpose.msra.mxu0 0.0
        %1198 = vmatprep.subr.mxu0 0.0
        %1199 = vmatpush1.xpose.msra.mxu0 0.0
        %1200 = vmatprep.subr.mxu0 0.0
        %1201 = vmatpush1.xpose.msra.mxu0 0.0
        %1202 = vmatprep.subr.mxu0 0.0
        %1203 = vmatpush1.xpose.msra.mxu0 0.0
        %1204 = vmatprep.subr.mxu0 0.0
        %1205 = vmatpush1.xpose.msra.mxu0 0.0
        %1206 = vmatprep.subr.mxu0 0.0
        %1207 = vmatpush1.xpose.msra.mxu0 0.0
        %1208 = vmatprep.subr.mxu0 0.0
        %1209 = vmatpush1.xpose.msra.mxu0 0.0
        %1210 = vmatprep.subr.mxu0 0.0
        %1211 = vmatpush1.xpose.msra.mxu0 0.0
        %1212 = vmatprep.subr.mxu0 0.0
        %1213 = vmatpush1.xpose.msra.mxu0 0.0
        %1214 = vmatprep.subr.mxu0 0.0
        %1215 = vmatpush1.xpose.msra.mxu0 0.0
        %1216 = vmatprep.subr.mxu0 0.0
        %1217 = vmatpush1.xpose.msra.mxu0 0.0
        %1218 = vmatprep.subr.mxu0 0.0
        %1219 = vmatpush1.xpose.msra.mxu0 0.0
        %1220 = vmatprep.subr.mxu0 0.0
        %1221 = vmatpush1.xpose.msra.mxu0 0.0
        %1222 = vmatprep.subr.mxu0 0.0
        %1223 = vmatpush1.xpose.msra.mxu0 0.0
        %1224 = vmatprep.subr.mxu0 0.0
        %1225 = vmatpush1.xpose.msra.mxu0 0.0
        %1226 = vmatprep.subr.mxu0 0.0
        %1227 = vmatpush1.xpose.msra.mxu0 0.0
        %1228 = vmatprep.subr.mxu0 0.0
        %1229 = vmatpush1.xpose.msra.mxu0 0.0
        %1230 = vmatprep.subr.mxu0 0.0
        %1231 = vmatpush1.xpose.msra.mxu0 0.0
        %1232 = vmatprep.subr.mxu0 0.0
        %1233 = vmatpush1.xpose.msra.mxu0 0.0
        %1234 = vmatprep.subr.mxu0 0.0
        %1235 = vmatpush1.xpose.msra.mxu0 0.0
        %1236 = vmatprep.subr.mxu0 0.0
        %1237 = vmatpush1.xpose.msra.mxu0 0.0
        %1238 = vmatprep.subr.mxu0 0.0
        %1239 = vmatpush1.xpose.msra.mxu0 0.0
        %1240 = vmatprep.subr.mxu0 0.0
        %1241 = vmatpush1.xpose.msra.mxu0 0.0
        %1242 = vmatprep.subr.mxu0 0.0
        %1243 = vmatpush1.xpose.msra.mxu0 0.0
        %1244 = vmatprep.mubr.f32.mxu0 0.0
        %1245 = vmatmul.mubr.f32.gmra.mrb[0].mxu0 %v1107
        %v1246 = vpop.f32.mrb[0].mxu0
        %v1247 = vadd.f32 0.0, %v1246
        %v1248 = vpop.f32.mrb[0].mxu0
        %1249 = vdwg.mxu0
        %s1250 = scalar_lea.vmem %s322, 8
        %1251 = vst.msk [vmem:[%s1250] sm:$0x3f] %vm1178, %v1247
        %s1252 = smul.u32 2, %s20
        %p1253 = scmp.lt.s32.totalorder %s1252, 3
        %s1254 = scalar_select %p1253, %s1252, 3
        %s1255 = smul.addr %s1254, 8
        %s1256 = scalar_lea.vmem %s8, %s1255
        // Predicated region
        $region57: #{tpu_custom_call.1} parent=51 // pred_check
          %p1257 = pneg %p211
        $region58: #{tpu_custom_call.1} parent=51 // pred_check_branch
          %1259 = sbr.rel (%p1257) target = $region60
        $region59: #{tpu_custom_call.1} parent=51 // pred_region
          %s1260 = smul.u32 2, %s20
        $region60: #{tpu_custom_call.1} parent=51 // pred_fallthru
          _
      $region52: #{tpu_custom_call.1} parent=5 // pred_fallthru
        _
      %p1261 = scmp.le.s32.totalorder 2, %s15
      // Predicated region
      $region61: #{tpu_custom_call.1} parent=5 // pred_check
        %p1262 = pneg %p1261
      $region62: #{tpu_custom_call.1} parent=5 // pred_check_branch
        %1264 = sbr.rel (%p1262) target = $region64
      $region63: #{tpu_custom_call.1} parent=5 // pred_region
        %s1265 = ssub.s32 %s15, 2
        // Predicated region
        $region65: #{tpu_custom_call.1} parent=63 // pred_check
          %p1266 = pneg %p217
        $region66: #{tpu_custom_call.1} parent=63 // pred_check_branch
          %1268 = sbr.rel (%p1266) target = $region68
        $region67: #{tpu_custom_call.1} parent=63 // pred_region
          %s1269 = smul.u32 2, %s21
          %p1270 = scmp.lt.s32.totalorder %s1269, 3
          %s1271 = scalar_select %p1270, %s1269, 3
          %s1272 = smul.addr %s1271, 8
          %s1273 = scalar_lea.vmem %s8, %s1272
        $region68: #{tpu_custom_call.1} parent=63 // pred_fallthru
          _
      $region64: #{tpu_custom_call.1} parent=5 // pred_fallthru
        _
    $region6: #{tpu_custom_call.1} parent=1 // loop_footer
      %s19 = sadd.s32 1, %s15
    $region7: #{tpu_custom_call.1} parent=1 // loop_footer_branch
      %14 = sbr.rel target = $region3
    $region8: #{tpu_custom_call.1} parent=1 // loop_exit
      _
    %1274 = vsyncpa [#allocation3], 1
    %s1275 = scalar_lea.sflag [#allocation3], 1
    %1276 = vsyncpa %s1275, 1

</llo_original>
